<compile_context>
chip_gen: v5e
topology: v5e:2x2
jax: 0.10.0
libtpu: 0.0.40
codegen_flags: <defaults>
</compile_context>

<pallas_src>
import functools

import jax
import jax.numpy as jnp
from jax.experimental import pallas as pl
from jax.experimental.pallas import tpu as pltpu

OUT_LANES = 128          # lane-dense output slab width
VMEM_BUDGET = 64 << 20   # conservative across chips (v7x physical VMEM is 64 MiB)


# ----------------------------- Pallas kernel ------------------------------- #

def _fused_gin_kernel(eps1p_ref,                     # scalar prefetch (SMEM): 1+eps per layer
                      a_ref, x_ref, w_ref, b_ref,    # per-graph A/X (bf16), stacked W (bf16) / b (f32)
                      wh_ref, bh_ref,                # per-graph head W (bf16) / b (f32) slabs
                      o_ref,                         # [Npad, 128] f32 output slab
                      *, num_layers):
    # Activation carried as a value through the (tiny) statically-unrolled loop:
    # no scratch buffer, no h copy, no per-layer vld/vst round-trip.
    h = x_ref[...]                                   # bf16 [Npad, Dpad]

    # GIN layer: h <- relu( ((1+eps_l) * h + A @ h) @ W_l + b_l )
    for l in range(num_layers):
        # bf16 MXU matmuls with f32 accumulation; VPU math stays f32.
        agg = jnp.dot(a_ref[...], h, preferred_element_type=jnp.float32)
        z = eps1p_ref[l] * h.astype(jnp.float32) + agg
        y = jnp.dot(z.astype(jnp.bfloat16), w_ref[l],
                    preferred_element_type=jnp.float32) + b_ref[l]
        h = jnp.maximum(y, 0.0).astype(jnp.bfloat16)

    # Head epilogue.  F.dropout(p=0.5) is identity in eval mode.
    # TODO(synk): training-mode dropout would need pltpu.prng_seed/prng_random_bits.
    y = jnp.dot(h, wh_ref[...], preferred_element_type=jnp.float32) + bh_ref[...]

    @pl.when(pl.program_id(0) == 0)                  # high graph: plain logits
    def _():
        o_ref[...] = y

    @pl.when(pl.program_id(0) == 1)                  # low graph: |low_mlp(h)|
    def _():
        o_ref[...] = jnp.abs(y)


# ------------------------------ Wrappers ----------------------------------- #

def _round_up(v, m):
    return ((v + m - 1) // m) * m


def _vmem_bytes_estimate(npad, dpad, num_layers):
    """Rough VMEM footprint (tile-padded); per-graph operands are double-buffered."""
    bf, f32 = 2, 4
    lane = lambda d: _round_up(d, 128)
    sub = lambda s: _round_up(s, 8)
    a = sub(npad) * lane(npad) * bf
    x = sub(npad) * lane(dpad) * bf
    w = num_layers * sub(dpad) * lane(dpad) * bf
    b = num_layers * sub(1) * lane(dpad) * f32
    wh = sub(dpad) * lane(OUT_LANES) * bf
    bh = sub(1) * lane(OUT_LANES) * f32
    out = sub(npad) * lane(OUT_LANES) * f32
    return 2 * (a + x + wh + bh + out) + (w + b)


def pack_gin_decoder_params(params):
    """Stack / zero-pad weights once so the fused kernel keeps them VMEM-resident."""
    layers = params["layers"]
    num_layers = len(layers)
    input_dim = layers[0][0].shape[0]
    hidden = layers[0][0].shape[1]
    dpad = _round_up(max(input_dim, hidden), 128)    # lane-dense feature dim

    w_stack = jnp.zeros((num_layers, dpad, dpad), jnp.float32)
    b_stack = jnp.zeros((num_layers, 1, dpad), jnp.float32)
    eps1p = jnp.zeros((num_layers,), jnp.float32)
    for l, (w, b, eps) in enumerate(layers):
        w_stack = w_stack.at[l, :w.shape[0], :w.shape[1]].set(w)
        b_stack = b_stack.at[l, :, :b.shape[1]].set(b)
        eps1p = eps1p.at[l].set(1.0 + eps.reshape(()))

    # Lane-dense head slabs: graph 0 (high) -> cols 0:2, graph 1 (low) -> col 0.
    wh = jnp.zeros((2, dpad, OUT_LANES), jnp.float32)
    bh = jnp.zeros((2, 1, OUT_LANES), jnp.float32)
    wh = wh.at[0, :hidden, 0:2].set(params["high_w"])
    bh = bh.at[0, :, 0:2].set(params["high_b"])
    wh = wh.at[1, :hidden, 0:1].set(params["low_w"])
    bh = bh.at[1, :, 0:1].set(params["low_b"])

    return {
        "eps1p": eps1p,                              # f32, SMEM scalar prefetch
        "w_stack": w_stack.astype(jnp.bfloat16),     # bf16 MXU operands
        "b_stack": b_stack,                          # f32 (bias add stays on f32 VPU)
        "head_w": wh.astype(jnp.bfloat16),
        "head_b": bh,
        "alpha": params["alpha"],
    }


@jax.jit
def gin_decoder_forward(packed, high_x, high_adj, low_x, low_adj):
    num_layers, dpad, _ = packed["w_stack"].shape
    n_high, n_low = high_x.shape[0], low_x.shape[0]
    # 128-align so A/X tiles are lane-dense and the VMEM accounting is exact.
    npad = _round_up(max(n_high, n_low, 8), 128)

    vmem_est = _vmem_bytes_estimate(npad, dpad, num_layers)
    if vmem_est > VMEM_BUDGET:
        # TODO(synk): for graphs whose double-buffered A exceeds the VMEM budget,
        # keep A in HBM (memory_space=pl.ANY) and stream 256-512 row tiles with
        # pltpu.emit_pipeline while h stays VMEM-resident.
        raise ValueError(
            f"graph too large for VMEM-resident A: ~{vmem_est >> 20} MiB needed, "
            f"budget {VMEM_BUDGET >> 20} MiB")
    vmem_limit = int(min(VMEM_BUDGET, max(32 << 20, 2 * vmem_est)))

    def pad_graph(x, adj):
        xp = jnp.zeros((npad, dpad), jnp.float32).at[:x.shape[0], :x.shape[1]].set(x)
        ap = jnp.zeros((npad, npad), jnp.float32).at[:adj.shape[0], :adj.shape[1]].set(adj)
        # bf16 MXU operands: edge multiplicities stay exact in bf16 up to 256.
        return xp.astype(jnp.bfloat16), ap.astype(jnp.bfloat16)

    xh, ah = pad_graph(high_x, high_adj)
    xl, al = pad_graph(low_x, low_adj)
    x_stack = jnp.stack([xh, xl])        # [2, Npad, Dpad] bf16
    a_stack = jnp.stack([ah, al])        # [2, Npad, Npad] bf16

    # NOTE: on v7x (2 TCs, 64 MiB VMEM) the grid=(2,) "parallel" axis gives each
    # core exactly one step, so pipeline_mode=pl.Buffered(1) on the A/X specs
    # would halve the dominant VMEM consumer there; on v5e/v6e the default
    # double-buffering hides graph 1's A DMA behind graph 0's compute.
    out = pl.pallas_call(
        functools.partial(_fused_gin_kernel, num_layers=num_layers),
        out_shape=jax.ShapeDtypeStruct((2, npad, OUT_LANES), jnp.float32),
        grid_spec=pltpu.PrefetchScalarGridSpec(
            num_scalar_prefetch=1,       # (1+eps) per layer -> SMEM
            grid=(2,),                   # one grid step per graph
            in_specs=[
                pl.BlockSpec((None, npad, npad), lambda g, *_: (g, 0, 0)),        # A (bf16)
                pl.BlockSpec((None, npad, dpad), lambda g, *_: (g, 0, 0)),        # X (bf16)
                pl.BlockSpec((num_layers, dpad, dpad), lambda g, *_: (0, 0, 0)),  # W stack (shared, bf16)
                pl.BlockSpec((num_layers, 1, dpad), lambda g, *_: (0, 0, 0)),     # b stack (shared, f32)
                pl.BlockSpec((None, dpad, OUT_LANES), lambda g, *_: (g, 0, 0)),   # head W slab (bf16)
                pl.BlockSpec((None, 1, OUT_LANES), lambda g, *_: (g, 0, 0)),      # head b slab (f32)
            ],
            out_specs=pl.BlockSpec((None, npad, OUT_LANES), lambda g, *_: (g, 0, 0)),
        ),
        compiler_params=pltpu.CompilerParams(
            dimension_semantics=("parallel",),       # one graph per TensorCore on v7x
            vmem_limit_bytes=vmem_limit),
    )(packed["eps1p"],
      a_stack, x_stack, packed["w_stack"], packed["b_stack"],
      packed["head_w"], packed["head_b"])

    high_out = out[0, :n_high, 0:2]
    low_out = out[1, :n_low, 0:1]
    alpha = jax.nn.sigmoid(packed["alpha"])          # scalar glue
    return high_out, low_out, alpha


# ------------------------------ Glue / setup -------------------------------- #

def edge_index_to_dense_adj(edge_index, num_nodes):
    """edge_index: [2, E] int32 (row 0 = src, row 1 = dst). A[dst, src] += 1."""
    src, dst = edge_index[0], edge_index[1]
    adj = jnp.zeros((num_nodes, num_nodes), jnp.float32)
    return adj.at[dst, src].add(1.0)


def init_params(key, input_dim, hidden_dim, num_layers=3):
    keys = jax.random.split(key, 2 * num_layers + 4)
    layers = []
    din = input_dim
    for i in range(num_layers):
        w = 0.1 * jax.random.normal(keys[2 * i], (din, hidden_dim), jnp.float32)
        b = 0.1 * jax.random.normal(keys[2 * i + 1], (1, hidden_dim), jnp.float32)
        eps = jnp.zeros((1,), jnp.float32)           # GINConv train_eps init = 0.0
        layers.append((w, b, eps))
        din = hidden_dim
    high_w = 0.1 * jax.random.normal(keys[-4], (hidden_dim, 2), jnp.float32)
    high_b = 0.1 * jax.random.normal(keys[-3], (1, 2), jnp.float32)
    low_w = 0.1 * jax.random.normal(keys[-2], (hidden_dim, 1), jnp.float32)
    low_b = 0.1 * jax.random.normal(keys[-1], (1, 1), jnp.float32)
    alpha = jnp.float32(0.0)                         # nn.Parameter(torch.tensor(0.0))
    return {
        "layers": layers,
        "high_w": high_w, "high_b": high_b,
        "low_w": low_w, "low_b": low_b,
        "alpha": alpha,
    }


def _reference_forward(params, high_x, high_adj, low_x, low_adj):
    dot = functools.partial(jnp.dot, precision=jax.lax.Precision.HIGHEST)

    def run(x, adj):
        h = x
        for (w, b, eps) in params["layers"]:
            z = (1.0 + eps.reshape(())) * h + dot(adj, h)
            h = jnp.maximum(dot(z, w) + b, 0.0)
        return h

    h_hi = run(high_x, high_adj)
    h_lo = run(low_x, low_adj)
    high_out = dot(h_hi, params["high_w"]) + params["high_b"]
    low_out = jnp.abs(dot(h_lo, params["low_w"]) + params["low_b"])
    return high_out, low_out, jax.nn.sigmoid(params["alpha"])


if __name__ == "__main__":
    input_dim, hidden_dim = 8, 32
    n_high, n_low = 16, 12
    e_high, e_low = 40, 24

    key = jax.random.PRNGKey(0)
    k_feat_h, k_feat_l, k_eh, k_el, k_param = jax.random.split(key, 5)

    high_x = jax.random.normal(k_feat_h, (n_high, input_dim), jnp.float32)
    low_x = jax.random.normal(k_feat_l, (n_low, input_dim), jnp.float32)

    high_edge_index = jax.random.randint(k_eh, (2, e_high), 0, n_high, jnp.int32)
    low_edge_index = jax.random.randint(k_el, (2, e_low), 0, n_low, jnp.int32)
    high_adj = edge_index_to_dense_adj(high_edge_index, n_high)
    low_adj = edge_index_to_dense_adj(low_edge_index, n_low)

    params = init_params(k_param, input_dim, hidden_dim, num_layers=3)
    packed = pack_gin_decoder_params(params)

    high_out, low_out, alpha = gin_decoder_forward(
        packed, high_x, high_adj, low_x, low_adj)
    jax.block_until_ready((high_out, low_out, alpha))

    assert high_out.shape == (n_high, 2)
    assert low_out.shape == (n_low, 1)
    assert bool(jnp.all(low_out >= 0.0))

    # Kernel uses bf16 MXU operands with f32 accumulation; reference is f32/HIGHEST.
    ref_hi, ref_lo, ref_alpha = _reference_forward(
        params, high_x, high_adj, low_x, low_adj)
    assert bool(jnp.allclose(high_out, ref_hi, rtol=3e-2, atol=3e-2))
    assert bool(jnp.allclose(low_out, ref_lo, rtol=3e-2, atol=3e-2))
    assert bool(jnp.allclose(alpha, ref_alpha))

    print("KERNEL_OK")
</pallas_src>

<mosaic_0001>
module attributes {stable_mosaic.version = 11 : i64} {
  func.func @_fused_gin_kernel(%arg0: i32, %arg1: memref<3xf32, #tpu.memory_space<smem>>, %arg2: memref<1x128x128xbf16, #tpu.memory_space<vmem>>, %arg3: memref<1x128x128xbf16, #tpu.memory_space<vmem>>, %arg4: memref<3x128x128xbf16, #tpu.memory_space<vmem>>, %arg5: memref<3x1x128xf32, #tpu.memory_space<vmem>>, %arg6: memref<1x128x128xbf16, #tpu.memory_space<vmem>>, %arg7: memref<1x1x128xf32, #tpu.memory_space<vmem>>, %arg8: memref<1x128x128xf32, #tpu.memory_space<vmem>>) attributes {dimension_semantics = [#tpu.dimension_semantics<parallel>], iteration_bounds = array<i64: 2>, scalar_prefetch = 1 : i64, scratch_operands = 0 : i64, tpu.core_type = #tpu.core_type<tc>, window_params = [{transform_indices = @transform_0, window_bounds = array<i64: 1, 128, 128>}, {transform_indices = @transform_1, window_bounds = array<i64: 1, 128, 128>}, {pipeline_mode = #tpu.pipeline_mode<synchronous>, transform_indices = @transform_2, window_bounds = array<i64: 3, 128, 128>}, {pipeline_mode = #tpu.pipeline_mode<synchronous>, transform_indices = @transform_3, window_bounds = array<i64: 3, 1, 128>}, {transform_indices = @transform_4, window_bounds = array<i64: 1, 128, 128>}, {transform_indices = @transform_5, window_bounds = array<i64: 1, 1, 128>}, {transform_indices = @transform_6, window_bounds = array<i64: 1, 128, 128>}]} {
    %c0 = arith.constant 0 : index
    %c0_0 = arith.constant 0 : index
    %c0_1 = arith.constant 0 : index
    %0 = vector.load %arg3[%c0, %c0_0, %c0_1] : memref<1x128x128xbf16, #tpu.memory_space<vmem>>, vector<1x128x128xbf16>
    %1 = vector.shape_cast %0 : vector<1x128x128xbf16> to vector<128x128xbf16>
    %c0_2 = arith.constant 0 : index
    %c0_3 = arith.constant 0 : index
    %c0_4 = arith.constant 0 : index
    %2 = vector.load %arg2[%c0_2, %c0_3, %c0_4] : memref<1x128x128xbf16, #tpu.memory_space<vmem>>, vector<1x128x128xbf16>
    %3 = vector.shape_cast %2 : vector<1x128x128xbf16> to vector<128x128xbf16>
    %cst = arith.constant dense<0.000000e+00> : vector<128x128xf32>
    %4 = tpu.matmul %3, %1, %cst {dimension_numbers = #tpu.dot_dimension_numbers<[1], [0], [0], [1], [0, 0, 1, 1], [], []>} : vector<128x128xbf16>, vector<128x128xbf16>, vector<128x128xf32> -> vector<128x128xf32>
    %c0_5 = arith.constant 0 : index
    %5 = memref.load %arg1[%c0_5] : memref<3xf32, #tpu.memory_space<smem>>
    %6 = arith.extf %1 : vector<128x128xbf16> to vector<128x128xf32>
    %7 = vector.broadcast %5 : f32 to vector<128x128xf32>
    %8 = arith.mulf %7, %6 : vector<128x128xf32>
    %9 = arith.addf %8, %4 : vector<128x128xf32>
    %10 = arith.truncf %9 : vector<128x128xf32> to vector<128x128xbf16>
    %c0_6 = arith.constant 0 : index
    %c0_7 = arith.constant 0 : index
    %c0_8 = arith.constant 0 : index
    %11 = vector.load %arg4[%c0_6, %c0_7, %c0_8] : memref<3x128x128xbf16, #tpu.memory_space<vmem>>, vector<1x128x128xbf16>
    %12 = vector.shape_cast %11 : vector<1x128x128xbf16> to vector<128x128xbf16>
    %cst_9 = arith.constant dense<0.000000e+00> : vector<128x128xf32>
    %13 = tpu.matmul %10, %12, %cst_9 {dimension_numbers = #tpu.dot_dimension_numbers<[1], [0], [0], [1], [0, 0, 1, 1], [], []>} : vector<128x128xbf16>, vector<128x128xbf16>, vector<128x128xf32> -> vector<128x128xf32>
    %c0_10 = arith.constant 0 : index
    %c0_11 = arith.constant 0 : index
    %c0_12 = arith.constant 0 : index
    %14 = vector.load %arg5[%c0_10, %c0_11, %c0_12] : memref<3x1x128xf32, #tpu.memory_space<vmem>>, vector<1x1x128xf32>
    %15 = vector.shape_cast %14 : vector<1x1x128xf32> to vector<1x128xf32>
    %16 = vector.broadcast %15 : vector<1x128xf32> to vector<128x128xf32>
    %17 = arith.addf %13, %16 : vector<128x128xf32>
    %cst_13 = arith.constant 0.000000e+00 : f32
    %18 = vector.broadcast %cst_13 : f32 to vector<128x128xf32>
    %19 = arith.maximumf %17, %18 : vector<128x128xf32>
    %20 = arith.truncf %19 : vector<128x128xf32> to vector<128x128xbf16>
    %c0_14 = arith.constant 0 : index
    %c0_15 = arith.constant 0 : index
    %c0_16 = arith.constant 0 : index
    %21 = vector.load %arg2[%c0_14, %c0_15, %c0_16] : memref<1x128x128xbf16, #tpu.memory_space<vmem>>, vector<1x128x128xbf16>
    %22 = vector.shape_cast %21 : vector<1x128x128xbf16> to vector<128x128xbf16>
    %cst_17 = arith.constant dense<0.000000e+00> : vector<128x128xf32>
    %23 = tpu.matmul %22, %20, %cst_17 {dimension_numbers = #tpu.dot_dimension_numbers<[1], [0], [0], [1], [0, 0, 1, 1], [], []>} : vector<128x128xbf16>, vector<128x128xbf16>, vector<128x128xf32> -> vector<128x128xf32>
    %c1 = arith.constant 1 : index
    %24 = memref.load %arg1[%c1] : memref<3xf32, #tpu.memory_space<smem>>
    %25 = arith.extf %20 : vector<128x128xbf16> to vector<128x128xf32>
    %26 = vector.broadcast %24 : f32 to vector<128x128xf32>
    %27 = arith.mulf %26, %25 : vector<128x128xf32>
    %28 = arith.addf %27, %23 : vector<128x128xf32>
    %29 = arith.truncf %28 : vector<128x128xf32> to vector<128x128xbf16>
    %c1_18 = arith.constant 1 : index
    %c0_19 = arith.constant 0 : index
    %c0_20 = arith.constant 0 : index
    %30 = vector.load %arg4[%c1_18, %c0_19, %c0_20] : memref<3x128x128xbf16, #tpu.memory_space<vmem>>, vector<1x128x128xbf16>
    %31 = vector.shape_cast %30 : vector<1x128x128xbf16> to vector<128x128xbf16>
    %cst_21 = arith.constant dense<0.000000e+00> : vector<128x128xf32>
    %32 = tpu.matmul %29, %31, %cst_21 {dimension_numbers = #tpu.dot_dimension_numbers<[1], [0], [0], [1], [0, 0, 1, 1], [], []>} : vector<128x128xbf16>, vector<128x128xbf16>, vector<128x128xf32> -> vector<128x128xf32>
    %c1_22 = arith.constant 1 : index
    %c0_23 = arith.constant 0 : index
    %c0_24 = arith.constant 0 : index
    %33 = vector.load %arg5[%c1_22, %c0_23, %c0_24] : memref<3x1x128xf32, #tpu.memory_space<vmem>>, vector<1x1x128xf32>
    %34 = vector.shape_cast %33 : vector<1x1x128xf32> to vector<1x128xf32>
    %35 = vector.broadcast %34 : vector<1x128xf32> to vector<128x128xf32>
    %36 = arith.addf %32, %35 : vector<128x128xf32>
    %cst_25 = arith.constant 0.000000e+00 : f32
    %37 = vector.broadcast %cst_25 : f32 to vector<128x128xf32>
    %38 = arith.maximumf %36, %37 : vector<128x128xf32>
    %39 = arith.truncf %38 : vector<128x128xf32> to vector<128x128xbf16>
    %c0_26 = arith.constant 0 : index
    %c0_27 = arith.constant 0 : index
    %c0_28 = arith.constant 0 : index
    %40 = vector.load %arg2[%c0_26, %c0_27, %c0_28] : memref<1x128x128xbf16, #tpu.memory_space<vmem>>, vector<1x128x128xbf16>
    %41 = vector.shape_cast %40 : vector<1x128x128xbf16> to vector<128x128xbf16>
    %cst_29 = arith.constant dense<0.000000e+00> : vector<128x128xf32>
    %42 = tpu.matmul %41, %39, %cst_29 {dimension_numbers = #tpu.dot_dimension_numbers<[1], [0], [0], [1], [0, 0, 1, 1], [], []>} : vector<128x128xbf16>, vector<128x128xbf16>, vector<128x128xf32> -> vector<128x128xf32>
    %c2 = arith.constant 2 : index
    %43 = memref.load %arg1[%c2] : memref<3xf32, #tpu.memory_space<smem>>
    %44 = arith.extf %39 : vector<128x128xbf16> to vector<128x128xf32>
    %45 = vector.broadcast %43 : f32 to vector<128x128xf32>
    %46 = arith.mulf %45, %44 : vector<128x128xf32>
    %47 = arith.addf %46, %42 : vector<128x128xf32>
    %48 = arith.truncf %47 : vector<128x128xf32> to vector<128x128xbf16>
    %c2_30 = arith.constant 2 : index
    %c0_31 = arith.constant 0 : index
    %c0_32 = arith.constant 0 : index
    %49 = vector.load %arg4[%c2_30, %c0_31, %c0_32] : memref<3x128x128xbf16, #tpu.memory_space<vmem>>, vector<1x128x128xbf16>
    %50 = vector.shape_cast %49 : vector<1x128x128xbf16> to vector<128x128xbf16>
    %cst_33 = arith.constant dense<0.000000e+00> : vector<128x128xf32>
    %51 = tpu.matmul %48, %50, %cst_33 {dimension_numbers = #tpu.dot_dimension_numbers<[1], [0], [0], [1], [0, 0, 1, 1], [], []>} : vector<128x128xbf16>, vector<128x128xbf16>, vector<128x128xf32> -> vector<128x128xf32>
    %c2_34 = arith.constant 2 : index
    %c0_35 = arith.constant 0 : index
    %c0_36 = arith.constant 0 : index
    %52 = vector.load %arg5[%c2_34, %c0_35, %c0_36] : memref<3x1x128xf32, #tpu.memory_space<vmem>>, vector<1x1x128xf32>
    %53 = vector.shape_cast %52 : vector<1x1x128xf32> to vector<1x128xf32>
    %54 = vector.broadcast %53 : vector<1x128xf32> to vector<128x128xf32>
    %55 = arith.addf %51, %54 : vector<128x128xf32>
    %cst_37 = arith.constant 0.000000e+00 : f32
    %56 = vector.broadcast %cst_37 : f32 to vector<128x128xf32>
    %57 = arith.maximumf %55, %56 : vector<128x128xf32>
    %58 = arith.truncf %57 : vector<128x128xf32> to vector<128x128xbf16>
    %c0_38 = arith.constant 0 : index
    %c0_39 = arith.constant 0 : index
    %c0_40 = arith.constant 0 : index
    %59 = vector.load %arg6[%c0_38, %c0_39, %c0_40] : memref<1x128x128xbf16, #tpu.memory_space<vmem>>, vector<1x128x128xbf16>
    %60 = vector.shape_cast %59 : vector<1x128x128xbf16> to vector<128x128xbf16>
    %cst_41 = arith.constant dense<0.000000e+00> : vector<128x128xf32>
    %61 = tpu.matmul %58, %60, %cst_41 {dimension_numbers = #tpu.dot_dimension_numbers<[1], [0], [0], [1], [0, 0, 1, 1], [], []>} : vector<128x128xbf16>, vector<128x128xbf16>, vector<128x128xf32> -> vector<128x128xf32>
    %c0_42 = arith.constant 0 : index
    %c0_43 = arith.constant 0 : index
    %c0_44 = arith.constant 0 : index
    %62 = vector.load %arg7[%c0_42, %c0_43, %c0_44] : memref<1x1x128xf32, #tpu.memory_space<vmem>>, vector<1x1x128xf32>
    %63 = vector.shape_cast %62 : vector<1x1x128xf32> to vector<1x128xf32>
    %64 = vector.broadcast %63 : vector<1x128xf32> to vector<128x128xf32>
    %65 = arith.addf %61, %64 : vector<128x128xf32>
    %c0_i32 = arith.constant 0 : i32
    %66 = arith.cmpi eq, %arg0, %c0_i32 : i32
    %67 = arith.extui %66 : i1 to i32
    %c0_i32_45 = arith.constant 0 : i32
    %68 = arith.cmpi ne, %67, %c0_i32_45 : i32
    scf.if %68 {
      %c0_47 = arith.constant 0 : index
      %c0_48 = arith.constant 0 : index
      %c0_49 = arith.constant 0 : index
      %72 = vector.load %arg8[%c0_47, %c0_48, %c0_49] : memref<1x128x128xf32, #tpu.memory_space<vmem>>, vector<1x128x128xf32>
      %73 = vector.shape_cast %72 : vector<1x128x128xf32> to vector<128x128xf32>
      %74 = vector.shape_cast %65 : vector<128x128xf32> to vector<1x128x128xf32>
      tpu.vector_store %arg8[%c0_47, %c0_48, %c0_49], %74 {strides = array<i32>} : memref<1x128x128xf32, #tpu.memory_space<vmem>>, vector<1x128x128xf32>,
    } else {
    }
    %c1_i32 = arith.constant 1 : i32
    %69 = arith.cmpi eq, %arg0, %c1_i32 : i32
    %70 = arith.extui %69 : i1 to i32
    %c0_i32_46 = arith.constant 0 : i32
    %71 = arith.cmpi ne, %70, %c0_i32_46 : i32
    scf.if %71 {
      %72 = math.absf %65 : vector<128x128xf32>
      %c0_47 = arith.constant 0 : index
      %c0_48 = arith.constant 0 : index
      %c0_49 = arith.constant 0 : index
      %73 = vector.load %arg8[%c0_47, %c0_48, %c0_49] : memref<1x128x128xf32, #tpu.memory_space<vmem>>, vector<1x128x128xf32>
      %74 = vector.shape_cast %73 : vector<1x128x128xf32> to vector<128x128xf32>
      %75 = vector.shape_cast %72 : vector<128x128xf32> to vector<1x128x128xf32>
      tpu.vector_store %arg8[%c0_47, %c0_48, %c0_49], %75 {strides = array<i32>} : memref<1x128x128xf32, #tpu.memory_space<vmem>>, vector<1x128x128xf32>,
    } else {
    }
    return
  }
  func.func @transform_0(%arg0: i32, %arg1: memref<3xf32, #tpu.memory_space<smem>>) -> (i32, i32, i32) {
    %c0_i32 = arith.constant 0 : i32
    %c0_i32_0 = arith.constant 0 : i32
    %c0_i32_1 = arith.constant 0 : i32
    return %arg0, %c0_i32, %c0_i32_0 : i32, i32, i32
  }
  func.func @transform_1(%arg0: i32, %arg1: memref<3xf32, #tpu.memory_space<smem>>) -> (i32, i32, i32) {
    %c0_i32 = arith.constant 0 : i32
    %c0_i32_0 = arith.constant 0 : i32
    %c0_i32_1 = arith.constant 0 : i32
    return %arg0, %c0_i32, %c0_i32_0 : i32, i32, i32
  }
  func.func @transform_2(%arg0: i32, %arg1: memref<3xf32, #tpu.memory_space<smem>>) -> (i32, i32, i32) {
    %c0_i32 = arith.constant 0 : i32
    %c0_i32_0 = arith.constant 0 : i32
    %c0_i32_1 = arith.constant 0 : i32
    %c0_i32_2 = arith.constant 0 : i32
    return %c0_i32, %c0_i32_0, %c0_i32_1 : i32, i32, i32
  }
  func.func @transform_3(%arg0: i32, %arg1: memref<3xf32, #tpu.memory_space<smem>>) -> (i32, i32, i32) {
    %c0_i32 = arith.constant 0 : i32
    %c0_i32_0 = arith.constant 0 : i32
    %c0_i32_1 = arith.constant 0 : i32
    %c0_i32_2 = arith.constant 0 : i32
    return %c0_i32, %c0_i32_0, %c0_i32_1 : i32, i32, i32
  }
  func.func @transform_4(%arg0: i32, %arg1: memref<3xf32, #tpu.memory_space<smem>>) -> (i32, i32, i32) {
    %c0_i32 = arith.constant 0 : i32
    %c0_i32_0 = arith.constant 0 : i32
    %c0_i32_1 = arith.constant 0 : i32
    return %arg0, %c0_i32, %c0_i32_0 : i32, i32, i32
  }
  func.func @transform_5(%arg0: i32, %arg1: memref<3xf32, #tpu.memory_space<smem>>) -> (i32, i32, i32) {
    %c0_i32 = arith.constant 0 : i32
    %c0_i32_0 = arith.constant 0 : i32
    %c0_i32_1 = arith.constant 0 : i32
    return %arg0, %c0_i32, %c0_i32_0 : i32, i32, i32
  }
  func.func @transform_6(%arg0: i32, %arg1: memref<3xf32, #tpu.memory_space<smem>>) -> (i32, i32, i32) {
    %c0_i32 = arith.constant 0 : i32
    %c0_i32_0 = arith.constant 0 : i32
    %c0_i32_1 = arith.constant 0 : i32
    return %arg0, %c0_i32, %c0_i32_0 : i32, i32, i32
  }
}

</mosaic_0001>

<llo_original>
// kernel: gin_decoder_forward.1
$region0: #{gin_decoder_forward.1}
  #allocation0 [shape = 'u32[]', space=smem, size = 0x4, offset = 0x4, fixed_abs, tag = 'smem constant byte address 0x4 - core index']
  #allocation1 [shape = 'u32[72,128]{1,0:T(1,128)}', space=vmem, size = 0x9000, scoped, tag = 'internal scratch']
  #allocation2 [shape = 's32[1]{0}', space=sflag, size = 0x4, scoped, tag = 'scoped memory for gin_decoder_forward.1']
  #allocation3 [shape = 'u8[512]{0}', space=smem, size = 0x200, scoped, tag = 'prefetched SMEM operand 0']
  %s0 = inlined_call_operand.vmem [shape: f32[3], index: 0, kind: input, shape index: {}]
  %s1 = inlined_call_operand.vmem [shape: bf16[2,128,128], index: 1, kind: input, shape index: {}]
  %s2 = inlined_call_operand.vmem [shape: bf16[2,128,128], index: 2, kind: input, shape index: {}]
  %s3 = inlined_call_operand.vmem [shape: bf16[3,128,128], index: 3, kind: input, shape index: {}]
  %s4 = inlined_call_operand.vmem [shape: f32[3,1,128], index: 4, kind: input, shape index: {}]
  %s5 = inlined_call_operand.vmem [shape: bf16[2,128,128], index: 5, kind: input, shape index: {}]
  %s6 = inlined_call_operand.vmem [shape: f32[2,1,128], index: 6, kind: input, shape index: {}]
  %s7 = inlined_call_operand.vmem [shape: f32[2,128,128], index: 7, kind: output, shape index: {}]
  %s8 = sld [smem:[#allocation0]]
  $region65: #{gin_decoder_forward.1} parent=0
    _
  %s10 = ssub.s32 1, %s8
  %s11 = scalar_select 0, %s10, %s8
  %s13 = sshll.u32 %s0, 4
  %s14 = int_to_ptr.vmem [resolvable:$true] %s13
  %16 = dma.vmem_to_smem %s14, 16, [#allocation3], [#allocation2]
  %18 = dma.done [#allocation2], 16
  %19 = sfence
  loop: start=0, step=1, limit=4
  $region2: #{gin_decoder_forward.1} parent=0 // loop_pre_header
    _
  $region3: #{gin_decoder_forward.1} parent=0 // loop_header
    %s21 = sphi 0, %s25
    %p22 = scmp.ge.s32.totalorder %s21, 4
    %s31 = sphi 0, %s33
    %s34 = sphi 0, %s31
    %s35 = sphi 0, %s34
    %s51 = sphi 0, %s35
    %s57 = sphi 0, %s59
    %s60 = sphi 0, %s57
    %s61 = sphi 0, %s60
    %s77 = sphi 0, %s61
    %s81 = sphi 0, %s81
    %s83 = sphi 0, %s81
    %s84 = sphi 0, %s83
    %s98 = sphi 0, %s84
    %s102 = sphi 0, %s102
    %s104 = sphi 0, %s102
    %s105 = sphi 0, %s104
    %s119 = sphi 0, %s105
    %s125 = sphi 0, %s127
    %s128 = sphi 0, %s125
    %s129 = sphi 0, %s128
    %s145 = sphi 0, %s129
    %s151 = sphi 0, %s153
    %s154 = sphi 0, %s151
    %s155 = sphi 0, %s154
    %s171 = sphi 0, %s155
    %s177 = sphi 0, %s179
    %s180 = sphi 0, %s177
    %s181 = sphi 0, %s180
    %s197 = sphi 0, %s181
  $region4: #{gin_decoder_forward.1} parent=0 // loop_header_branch
    %24 = sbr.rel (%p22) target = $region8
  $region5: #{gin_decoder_forward.1} parent=0 // loop_body
    %s26 = ssub.s32 %s21, 1
    %s27 = ssub.s32 %s21, 2
    %s28 = sadd.s32 %s21, 1
    %s29 = ssub.s32 %s21, %s28
    %p30 = scmp.eq.s32.totalorder %s29, 0
    %s32 = sadd.s32 %s31, 1
    %s33 = scalar_select %p30, %s31, %s32
    %p36 = pneg %p30
    %p37 = scmp.eq.s32.totalorder %s21, 1
    %p38 = por %p36, %p37
    %p39 = scmp.ne.s32.totalorder %s31, %s34
    %p40 = scmp.eq.s32.totalorder %s21, 0
    %p41 = por %p39, %p40
    %p42 = scmp.ne.s32.totalorder %s31, %s34
    %p43 = scmp.eq.s32.totalorder %s26, 1
    %p44 = por %p42, %p43
    %p45 = scmp.ne.s32.totalorder %s34, %s35
    %p46 = scmp.eq.s32.totalorder %s26, 0
    %p47 = por %p45, %p46
    %p48 = scmp.ne.s32.totalorder %s34, %s35
    %p49 = scmp.eq.s32.totalorder %s27, 1
    %p50 = por %p48, %p49
    %p52 = scmp.ne.s32.totalorder %s35, %s51
    %p53 = scmp.eq.s32.totalorder %s27, 0
    %p54 = por %p52, %p53
    %s55 = ssub.s32 %s21, %s28
    %p56 = scmp.eq.s32.totalorder %s55, 0
    %s58 = sadd.s32 %s57, 1
    %s59 = scalar_select %p56, %s57, %s58
    %p62 = pneg %p56
    %p63 = scmp.eq.s32.totalorder %s21, 1
    %p64 = por %p62, %p63
    %p65 = scmp.ne.s32.totalorder %s57, %s60
    %p66 = scmp.eq.s32.totalorder %s21, 0
    %p67 = por %p65, %p66
    %p68 = scmp.ne.s32.totalorder %s57, %s60
    %p69 = scmp.eq.s32.totalorder %s26, 1
    %p70 = por %p68, %p69
    %p71 = scmp.ne.s32.totalorder %s60, %s61
    %p72 = scmp.eq.s32.totalorder %s26, 0
    %p73 = por %p71, %p72
    %p74 = scmp.ne.s32.totalorder %s60, %s61
    %p75 = scmp.eq.s32.totalorder %s27, 1
    %p76 = por %p74, %p75
    %p78 = scmp.ne.s32.totalorder %s61, %s77
    %p79 = scmp.eq.s32.totalorder %s27, 0
    %p80 = por %p78, %p79
    %s82 = sadd.s32 %s81, 1
    %p85 = scmp.eq.s32.totalorder %s21, 1
    %p86 = scmp.ne.s32.totalorder %s81, %s83
    %p87 = scmp.eq.s32.totalorder %s21, 0
    %p88 = por %p86, %p87
    %p89 = scmp.ne.s32.totalorder %s81, %s83
    %p90 = scmp.eq.s32.totalorder %s26, 1
    %p91 = por %p89, %p90
    %p92 = scmp.ne.s32.totalorder %s83, %s84
    %p93 = scmp.eq.s32.totalorder %s26, 0
    %p94 = por %p92, %p93
    %p95 = scmp.ne.s32.totalorder %s83, %s84
    %p96 = scmp.eq.s32.totalorder %s27, 1
    %p97 = por %p95, %p96
    %p99 = scmp.ne.s32.totalorder %s84, %s98
    %p100 = scmp.eq.s32.totalorder %s27, 0
    %p101 = por %p99, %p100
    %s103 = sadd.s32 %s102, 1
    %p106 = scmp.eq.s32.totalorder %s21, 1
    %p107 = scmp.ne.s32.totalorder %s102, %s104
    %p108 = scmp.eq.s32.totalorder %s21, 0
    %p109 = por %p107, %p108
    %p110 = scmp.ne.s32.totalorder %s102, %s104
    %p111 = scmp.eq.s32.totalorder %s26, 1
    %p112 = por %p110, %p111
    %p113 = scmp.ne.s32.totalorder %s104, %s105
    %p114 = scmp.eq.s32.totalorder %s26, 0
    %p115 = por %p113, %p114
    %p116 = scmp.ne.s32.totalorder %s104, %s105
    %p117 = scmp.eq.s32.totalorder %s27, 1
    %p118 = por %p116, %p117
    %p120 = scmp.ne.s32.totalorder %s105, %s119
    %p121 = scmp.eq.s32.totalorder %s27, 0
    %p122 = por %p120, %p121
    %s123 = ssub.s32 %s21, %s28
    %p124 = scmp.eq.s32.totalorder %s123, 0
    %s126 = sadd.s32 %s125, 1
    %s127 = scalar_select %p124, %s125, %s126
    %p130 = pneg %p124
    %p131 = scmp.eq.s32.totalorder %s21, 1
    %p132 = por %p130, %p131
    %p133 = scmp.ne.s32.totalorder %s125, %s128
    %p134 = scmp.eq.s32.totalorder %s21, 0
    %p135 = por %p133, %p134
    %p136 = scmp.ne.s32.totalorder %s125, %s128
    %p137 = scmp.eq.s32.totalorder %s26, 1
    %p138 = por %p136, %p137
    %p139 = scmp.ne.s32.totalorder %s128, %s129
    %p140 = scmp.eq.s32.totalorder %s26, 0
    %p141 = por %p139, %p140
    %p142 = scmp.ne.s32.totalorder %s128, %s129
    %p143 = scmp.eq.s32.totalorder %s27, 1
    %p144 = por %p142, %p143
    %p146 = scmp.ne.s32.totalorder %s129, %s145
    %p147 = scmp.eq.s32.totalorder %s27, 0
    %p148 = por %p146, %p147
    %s149 = ssub.s32 %s21, %s28
    %p150 = scmp.eq.s32.totalorder %s149, 0
    %s152 = sadd.s32 %s151, 1
    %s153 = scalar_select %p150, %s151, %s152
    %p156 = pneg %p150
    %p157 = scmp.eq.s32.totalorder %s21, 1
    %p158 = por %p156, %p157
    %p159 = scmp.ne.s32.totalorder %s151, %s154
    %p160 = scmp.eq.s32.totalorder %s21, 0
    %p161 = por %p159, %p160
    %p162 = scmp.ne.s32.totalorder %s151, %s154
    %p163 = scmp.eq.s32.totalorder %s26, 1
    %p164 = por %p162, %p163
    %p165 = scmp.ne.s32.totalorder %s154, %s155
    %p166 = scmp.eq.s32.totalorder %s26, 0
    %p167 = por %p165, %p166
    %p168 = scmp.ne.s32.totalorder %s154, %s155
    %p169 = scmp.eq.s32.totalorder %s27, 1
    %p170 = por %p168, %p169
    %p172 = scmp.ne.s32.totalorder %s155, %s171
    %p173 = scmp.eq.s32.totalorder %s27, 0
    %p174 = por %p172, %p173
    %s175 = ssub.s32 %s21, %s28
    %p176 = scmp.eq.s32.totalorder %s175, 0
    %s178 = sadd.s32 %s177, 1
    %s179 = scalar_select %p176, %s177, %s178
    %p182 = pneg %p176
    %p183 = scmp.eq.s32.totalorder %s21, 1
    %p184 = por %p182, %p183
    %p185 = scmp.ne.s32.totalorder %s177, %s180
    %p186 = scmp.eq.s32.totalorder %s21, 0
    %p187 = por %p185, %p186
    %p188 = scmp.ne.s32.totalorder %s177, %s180
    %p189 = scmp.eq.s32.totalorder %s26, 1
    %p190 = por %p188, %p189
    %p191 = scmp.ne.s32.totalorder %s180, %s181
    %p192 = scmp.eq.s32.totalorder %s26, 0
    %p193 = por %p191, %p192
    %p194 = scmp.ne.s32.totalorder %s180, %s181
    %p195 = scmp.eq.s32.totalorder %s27, 1
    %p196 = por %p194, %p195
    %p198 = scmp.ne.s32.totalorder %s181, %s197
    %p199 = scmp.eq.s32.totalorder %s27, 0
    %p200 = por %p198, %p199
    %p201 = scmp.le.s32.totalorder 1, %s21
    %p202 = scmp.lt.s32.totalorder %s21, 3
    %p203 = pnand %p201, %p202
    %p204 = pneg %p203
    // Predicated region
    $region9: #{gin_decoder_forward.1} parent=5 // pred_check
      _
    $region10: #{gin_decoder_forward.1} parent=5 // pred_check_branch
      %206 = sbr.rel (%p203) target = $region12
    $region11: #{gin_decoder_forward.1} parent=5 // pred_region
      %s207 = ssub.s32 %s21, 1
      // Predicated region
      $region13: #{gin_decoder_forward.1} parent=11 // pred_check
        %p208 = pneg %p94
      $region14: #{gin_decoder_forward.1} parent=11 // pred_check_branch
        %210 = sbr.rel (%p208) target = $region16
      $region15: #{gin_decoder_forward.1} parent=11 // pred_region
        _
      $region16: #{gin_decoder_forward.1} parent=11 // pred_fallthru
        _
      // Predicated region
      $region17: #{gin_decoder_forward.1} parent=11 // pred_check
        %p211 = pneg %p115
      $region18: #{gin_decoder_forward.1} parent=11 // pred_check_branch
        %213 = sbr.rel (%p211) target = $region20
      $region19: #{gin_decoder_forward.1} parent=11 // pred_region
        _
      $region20: #{gin_decoder_forward.1} parent=11 // pred_fallthru
        _
    $region12: #{gin_decoder_forward.1} parent=5 // pred_fallthru
      _
    %p214 = scmp.lt.s32.totalorder %s21, 2
    // Predicated region
    $region21: #{gin_decoder_forward.1} parent=5 // pred_check
      %p215 = pneg %p214
    $region22: #{gin_decoder_forward.1} parent=5 // pred_check_branch
      %217 = sbr.rel (%p215) target = $region24
    $region23: #{gin_decoder_forward.1} parent=5 // pred_region
      // Predicated region
      $region25: #{gin_decoder_forward.1} parent=23 // pred_check
        %p218 = pneg %p41
      $region26: #{gin_decoder_forward.1} parent=23 // pred_check_branch
        %220 = sbr.rel (%p218) target = $region28
      $region27: #{gin_decoder_forward.1} parent=23 // pred_region
        %p221 = scmp.lt.s32.totalorder %s21, 1
        %s222 = scalar_select %p221, %s21, 1
        %s223 = smul.addr %s222, 16
        %s224 = smul.addr %s223, 4
        %s225 = scalar_lea.vmem %s1, %s224
      $region28: #{gin_decoder_forward.1} parent=23 // pred_fallthru
        _
      // Predicated region
      $region29: #{gin_decoder_forward.1} parent=23 // pred_check
        %p226 = pneg %p67
      $region30: #{gin_decoder_forward.1} parent=23 // pred_check_branch
        %228 = sbr.rel (%p226) target = $region32
      $region31: #{gin_decoder_forward.1} parent=23 // pred_region
        %p229 = scmp.lt.s32.totalorder %s21, 1
        %s230 = scalar_select %p229, %s21, 1
        %s231 = smul.addr %s230, 16
        %s232 = smul.addr %s231, 4
        %s233 = scalar_lea.vmem %s2, %s232
      $region32: #{gin_decoder_forward.1} parent=23 // pred_fallthru
        _
      // Predicated region
      $region33: #{gin_decoder_forward.1} parent=23 // pred_check
        %p234 = pneg %p135
      $region34: #{gin_decoder_forward.1} parent=23 // pred_check_branch
        %236 = sbr.rel (%p234) target = $region36
      $region35: #{gin_decoder_forward.1} parent=23 // pred_region
        %p237 = scmp.lt.s32.totalorder %s21, 1
        %s238 = scalar_select %p237, %s21, 1
        %s239 = smul.addr %s238, 16
        %s240 = smul.addr %s239, 4
        %s241 = scalar_lea.vmem %s5, %s240
      $region36: #{gin_decoder_forward.1} parent=23 // pred_fallthru
        _
      // Predicated region
      $region37: #{gin_decoder_forward.1} parent=23 // pred_check
        %p242 = pneg %p161
      $region38: #{gin_decoder_forward.1} parent=23 // pred_check_branch
        %244 = sbr.rel (%p242) target = $region40
      $region39: #{gin_decoder_forward.1} parent=23 // pred_region
        %p245 = scmp.lt.s32.totalorder %s21, 1
        %s246 = scalar_select %p245, %s21, 1
        %s247 = scalar_lea.vmem %s6, %s246
      $region40: #{gin_decoder_forward.1} parent=23 // pred_fallthru
        _
    $region24: #{gin_decoder_forward.1} parent=5 // pred_fallthru
      _
    %p248 = scmp.le.s32.totalorder 1, %s21
    %p249 = scmp.lt.s32.totalorder %s21, 3
    %p250 = pnand %p248, %p249
    %p251 = pneg %p250
    // Predicated region
    $region41: #{gin_decoder_forward.1} parent=5 // pred_check
      _
    $region42: #{gin_decoder_forward.1} parent=5 // pred_check_branch
      %253 = sbr.rel (%p250) target = $region44
    $region43: #{gin_decoder_forward.1} parent=5 // pred_region
      %s254 = ssub.s32 %s21, 1
      %p255 = scmp.lt.s32.totalorder %s26, 1
      %s256 = scalar_select %p255, %s26, 1
      %s257 = smul.addr %s256, 16
      %s258 = smul.addr %s257, 4
      %s259 = scalar_lea.vmem %s1, %s258
      %p260 = pneg %p47
      %p261 = pneg %p44
      %p262 = scmp.lt.s32.totalorder %s26, 1
      %s263 = scalar_select %p262, %s26, 1
      %s264 = smul.addr %s263, 16
      %s265 = smul.addr %s264, 4
      %s266 = scalar_lea.vmem %s2, %s265
      %p267 = pneg %p73
      %p268 = pneg %p70
      %p269 = pneg %p94
      %p270 = pneg %p91
      %p271 = pneg %p115
      %p272 = pneg %p112
      %p273 = scmp.lt.s32.totalorder %s26, 1
      %s274 = scalar_select %p273, %s26, 1
      %s275 = smul.addr %s274, 16
      %s276 = smul.addr %s275, 4
      %s277 = scalar_lea.vmem %s5, %s276
      %p278 = pneg %p141
      %p279 = pneg %p138
      %p280 = scmp.lt.s32.totalorder %s26, 1
      %s281 = scalar_select %p280, %s26, 1
      %s282 = scalar_lea.vmem %s6, %s281
      %p283 = pneg %p167
      %p284 = pneg %p164
      %p285 = pneg %p193
      %p286 = pneg %p190
      %p287 = scmp.lt.s32.totalorder %s26, 1
      %s288 = scalar_select %p287, %s26, 1
      %s289 = smul.addr %s288, 16
      %s290 = smul.addr %s289, 8
      %s291 = scalar_lea.vmem %s7, %s290
      %p292 = scmp.lt.s32.totalorder %s26, 1
      %s293 = scalar_select %p292, %s26, 1
      %s294 = smul.addr %s293, 16
      %s295 = smul.addr %s294, 4
      %s296 = scalar_lea.vmem %s1, %s295
      %p297 = scmp.lt.s32.totalorder %s26, 1
      %s298 = scalar_select %p297, %s26, 1
      %s299 = smul.addr %s298, 16
      %s300 = smul.addr %s299, 4
      %s301 = scalar_lea.vmem %s2, %s300
      %p302 = scmp.lt.s32.totalorder %s26, 1
      %s303 = scalar_select %p302, %s26, 1
      %s304 = smul.addr %s303, 16
      %s305 = smul.addr %s304, 4
      %s306 = scalar_lea.vmem %s5, %s305
      %p307 = scmp.lt.s32.totalorder %s26, 1
      %s308 = scalar_select %p307, %s26, 1
      %s309 = scalar_lea.vmem %s6, %s308
      %p310 = scmp.lt.s32.totalorder %s26, 1
      %s311 = scalar_select %p310, %s26, 1
      %s312 = smul.addr %s311, 16
      %s313 = smul.addr %s312, 8
      %s314 = scalar_lea.vmem %s7, %s313
      %v315 = vld [vmem:[%s301] sm:$0xf]
      %v316 = vld [vmem:[%s301 + $0x4] sm:$0xf]
      %v317 = vld [vmem:[%s301 + $0x8] sm:$0xf]
      %v318 = vld [vmem:[%s301 + $0xc] sm:$0xf]
      %v319 = vld [vmem:[%s301 + $0x10] sm:$0xf]
      %v320 = vld [vmem:[%s301 + $0x14] sm:$0xf]
      %v321 = vld [vmem:[%s301 + $0x18] sm:$0xf]
      %v322 = vld [vmem:[%s301 + $0x1c] sm:$0xf]
      %v323 = vld [vmem:[%s301 + $0x20] sm:$0xf]
      %v324 = vld [vmem:[%s301 + $0x24] sm:$0xf]
      %v325 = vld [vmem:[%s301 + $0x28] sm:$0xf]
      %v326 = vld [vmem:[%s301 + $0x2c] sm:$0xf]
      %v327 = vld [vmem:[%s301 + $0x30] sm:$0xf]
      %v328 = vld [vmem:[%s301 + $0x34] sm:$0xf]
      %v329 = vld [vmem:[%s301 + $0x38] sm:$0xf]
      %v330 = vld [vmem:[%s301 + $0x3c] sm:$0xf]
      %v331 = vld [vmem:[%s296] sm:$0xf]
      %v332 = vld [vmem:[%s296 + $0x4] sm:$0xf]
      %v333 = vld [vmem:[%s296 + $0x8] sm:$0xf]
      %v334 = vld [vmem:[%s296 + $0xc] sm:$0xf]
      %v335 = vld [vmem:[%s296 + $0x10] sm:$0xf]
      %v336 = vld [vmem:[%s296 + $0x14] sm:$0xf]
      %v337 = vld [vmem:[%s296 + $0x18] sm:$0xf]
      %v338 = vld [vmem:[%s296 + $0x1c] sm:$0xf]
      %v339 = vld [vmem:[%s296 + $0x20] sm:$0xf]
      %v340 = vld [vmem:[%s296 + $0x24] sm:$0xf]
      %v341 = vld [vmem:[%s296 + $0x28] sm:$0xf]
      %v342 = vld [vmem:[%s296 + $0x2c] sm:$0xf]
      %v343 = vld [vmem:[%s296 + $0x30] sm:$0xf]
      %v344 = vld [vmem:[%s296 + $0x34] sm:$0xf]
      %v345 = vld [vmem:[%s296 + $0x38] sm:$0xf]
      %v346 = vld [vmem:[%s296 + $0x3c] sm:$0xf]
      %v363 = vunpack.c.l.b16 %v331
      %v364 = vunpack.c.l.b16 %v332
      %v365 = vunpack.c.l.b16 %v333
      %v366 = vunpack.c.l.b16 %v334
      %v367 = vunpack.c.l.b16 %v335
      %v368 = vunpack.c.l.b16 %v336
      %v369 = vunpack.c.l.b16 %v337
      %v370 = vunpack.c.l.b16 %v338
      %v371 = vunpack.c.l.b16 %v339
      %v372 = vunpack.c.l.b16 %v340
      %v373 = vunpack.c.l.b16 %v341
      %v374 = vunpack.c.l.b16 %v342
      %v375 = vunpack.c.l.b16 %v343
      %v376 = vunpack.c.l.b16 %v344
      %v377 = vunpack.c.l.b16 %v345
      %v378 = vunpack.c.l.b16 %v346
      %v379 = vpack.c.b16 %v364, %v363
      %v380 = vpack.c.b16 %v366, %v365
      %v381 = vpack.c.b16 %v368, %v367
      %v382 = vpack.c.b16 %v370, %v369
      %v383 = vpack.c.b16 %v372, %v371
      %v384 = vpack.c.b16 %v374, %v373
      %v385 = vpack.c.b16 %v376, %v375
      %v386 = vpack.c.b16 %v378, %v377
      %v411 = vunpack.c.l.b16 %v315
      %v412 = vunpack.c.l.b16 %v316
      %v413 = vunpack.c.l.b16 %v317
      %v414 = vunpack.c.l.b16 %v318
      %v415 = vunpack.c.l.b16 %v319
      %v416 = vunpack.c.l.b16 %v320
      %v417 = vunpack.c.l.b16 %v321
      %v418 = vunpack.c.l.b16 %v322
      %v419 = vunpack.c.l.b16 %v323
      %v420 = vunpack.c.l.b16 %v324
      %v421 = vunpack.c.l.b16 %v325
      %v422 = vunpack.c.l.b16 %v326
      %v423 = vunpack.c.l.b16 %v327
      %v424 = vunpack.c.l.b16 %v328
      %v425 = vunpack.c.l.b16 %v329
      %v426 = vunpack.c.l.b16 %v330
      %v427 = vpack.c.b16 %v412, %v411
      %v428 = vpack.c.b16 %v414, %v413
      %v429 = vpack.c.b16 %v416, %v415
      %v430 = vpack.c.b16 %v418, %v417
      %v431 = vpack.c.b16 %v420, %v419
      %v432 = vpack.c.b16 %v422, %v421
      %v433 = vpack.c.b16 %v424, %v423
      %v434 = vpack.c.b16 %v426, %v425
      %443 = vmatpush.bf16.msra.mxu0 %v434
      %444 = vmatpush.bf16.msra.mxu0 %v433
      %445 = vmatpush.bf16.msra.mxu0 %v432
      %446 = vmatpush.bf16.msra.mxu0 %v431
      %447 = vmatpush.bf16.msra.mxu0 %v430
      %448 = vmatpush.bf16.msra.mxu0 %v429
      %449 = vmatpush.bf16.msra.mxu0 %v428
      %450 = vmatpush.bf16.msra.mxu0 %v427
      %451 = vmatmul.bf16.gmra.mxu0 %v379
      %v452 = vpop.f32.mrf.mxu0
      %v453 = vadd.f32 0.0, %v452
      %v454 = vpop.f32.mrf.mxu0
      %v455 = vadd.f32 0.0, %v454
      %456 = vmatmul.bf16.gmra.mxu0 %v380
      %v457 = vpop.f32.mrf.mxu0
      %v458 = vadd.f32 0.0, %v457
      %v459 = vpop.f32.mrf.mxu0
      %v460 = vadd.f32 0.0, %v459
      %461 = vmatmul.bf16.gmra.mxu0 %v381
      %v462 = vpop.f32.mrf.mxu0
      %v463 = vadd.f32 0.0, %v462
      %v464 = vpop.f32.mrf.mxu0
      %v465 = vadd.f32 0.0, %v464
      %466 = vmatmul.bf16.gmra.mxu0 %v382
      %v467 = vpop.f32.mrf.mxu0
      %v468 = vadd.f32 0.0, %v467
      %v469 = vpop.f32.mrf.mxu0
      %v470 = vadd.f32 0.0, %v469
      %471 = vmatmul.bf16.gmra.mxu0 %v383
      %v472 = vpop.f32.mrf.mxu0
      %v473 = vadd.f32 0.0, %v472
      %v474 = vpop.f32.mrf.mxu0
      %v475 = vadd.f32 0.0, %v474
      %476 = vmatmul.bf16.gmra.mxu0 %v384
      %v477 = vpop.f32.mrf.mxu0
      %v478 = vadd.f32 0.0, %v477
      %v479 = vpop.f32.mrf.mxu0
      %v480 = vadd.f32 0.0, %v479
      %481 = vmatmul.bf16.gmra.mxu0 %v385
      %v482 = vpop.f32.mrf.mxu0
      %v483 = vadd.f32 0.0, %v482
      %v484 = vpop.f32.mrf.mxu0
      %v485 = vadd.f32 0.0, %v484
      %486 = vmatmul.bf16.gmra.mxu0 %v386
      %v487 = vpop.f32.mrf.mxu0
      %v488 = vadd.f32 0.0, %v487
      %v489 = vpop.f32.mrf.mxu0
      %v490 = vadd.f32 0.0, %v489
      %491 = vdwg.mxu0
      %s492 = sld [smem:[#allocation3]]
      %v493 = vunpack.c.l.bf16 %v315
      %v494 = vunpack.c.l.bf16 %v316
      %v495 = vunpack.c.l.bf16 %v317
      %v496 = vunpack.c.l.bf16 %v318
      %v497 = vunpack.c.l.bf16 %v319
      %v498 = vunpack.c.l.bf16 %v320
      %v499 = vunpack.c.l.bf16 %v321
      %v500 = vunpack.c.l.bf16 %v322
      %v501 = vunpack.c.l.bf16 %v323
      %v502 = vunpack.c.l.bf16 %v324
      %v503 = vunpack.c.l.bf16 %v325
      %v504 = vunpack.c.l.bf16 %v326
      %v505 = vunpack.c.l.bf16 %v327
      %v506 = vunpack.c.l.bf16 %v328
      %v507 = vunpack.c.l.bf16 %v329
      %v508 = vunpack.c.l.bf16 %v330
      %v509 = vstv %s492
      %v510 = vmul.f32 %v509, %v493
      %v511 = vmul.f32 %v509, %v494
      %v512 = vmul.f32 %v509, %v495
      %v513 = vmul.f32 %v509, %v496
      %v514 = vmul.f32 %v509, %v497
      %v515 = vmul.f32 %v509, %v498
      %v516 = vmul.f32 %v509, %v499
      %v517 = vmul.f32 %v509, %v500
      %v518 = vmul.f32 %v509, %v501
      %v519 = vmul.f32 %v509, %v502
      %v520 = vmul.f32 %v509, %v503
      %v521 = vmul.f32 %v509, %v504
      %v522 = vmul.f32 %v509, %v505
      %v523 = vmul.f32 %v509, %v506
      %v524 = vmul.f32 %v509, %v507
      %v525 = vmul.f32 %v509, %v508
      %v526 = vadd.f32 %v510, %v453
      %v527 = vadd.f32 %v511, %v455
      %v528 = vadd.f32 %v512, %v458
      %v529 = vadd.f32 %v513, %v460
      %v530 = vadd.f32 %v514, %v463
      %v531 = vadd.f32 %v515, %v465
      %v532 = vadd.f32 %v516, %v468
      %v533 = vadd.f32 %v517, %v470
      %v534 = vadd.f32 %v518, %v473
      %v535 = vadd.f32 %v519, %v475
      %v536 = vadd.f32 %v520, %v478
      %v537 = vadd.f32 %v521, %v480
      %v538 = vadd.f32 %v522, %v483
      %v539 = vadd.f32 %v523, %v485
      %v540 = vadd.f32 %v524, %v488
      %v541 = vadd.f32 %v525, %v490
      %v542 = vpack.c.bf16 %v527, %v526
      %v543 = vpack.c.bf16 %v529, %v528
      %v544 = vpack.c.bf16 %v531, %v530
      %v545 = vpack.c.bf16 %v533, %v532
      %v546 = vpack.c.bf16 %v535, %v534
      %v547 = vpack.c.bf16 %v537, %v536
      %v548 = vpack.c.bf16 %v539, %v538
      %v549 = vpack.c.bf16 %v541, %v540
      %v550 = vld [vmem:[%s3] sm:$0xf]
      %v551 = vld [vmem:[%s3 + $0x4] sm:$0xf]
      %v552 = vld [vmem:[%s3 + $0x8] sm:$0xf]
      %v553 = vld [vmem:[%s3 + $0xc] sm:$0xf]
      %v554 = vld [vmem:[%s3 + $0x10] sm:$0xf]
      %v555 = vld [vmem:[%s3 + $0x14] sm:$0xf]
      %v556 = vld [vmem:[%s3 + $0x18] sm:$0xf]
      %v557 = vld [vmem:[%s3 + $0x1c] sm:$0xf]
      %v558 = vld [vmem:[%s3 + $0x20] sm:$0xf]
      %v559 = vld [vmem:[%s3 + $0x24] sm:$0xf]
      %v560 = vld [vmem:[%s3 + $0x28] sm:$0xf]
      %v561 = vld [vmem:[%s3 + $0x2c] sm:$0xf]
      %v562 = vld [vmem:[%s3 + $0x30] sm:$0xf]
      %v563 = vld [vmem:[%s3 + $0x34] sm:$0xf]
      %v564 = vld [vmem:[%s3 + $0x38] sm:$0xf]
      %v565 = vld [vmem:[%s3 + $0x3c] sm:$0xf]
      %v566 = vld [vmem:[%s4] sm:$0x1]
      %v568 = vperm.slane %v566, 0
      %v586 = vunpack.c.l.b16 %v550
      %v587 = vunpack.c.l.b16 %v551
      %v588 = vunpack.c.l.b16 %v552
      %v589 = vunpack.c.l.b16 %v553
      %v590 = vunpack.c.l.b16 %v554
      %v591 = vunpack.c.l.b16 %v555
      %v592 = vunpack.c.l.b16 %v556
      %v593 = vunpack.c.l.b16 %v557
      %v594 = vunpack.c.l.b16 %v558
      %v595 = vunpack.c.l.b16 %v559
      %v596 = vunpack.c.l.b16 %v560
      %v597 = vunpack.c.l.b16 %v561
      %v598 = vunpack.c.l.b16 %v562
      %v599 = vunpack.c.l.b16 %v563
      %v600 = vunpack.c.l.b16 %v564
      %v601 = vunpack.c.l.b16 %v565
      %v602 = vpack.c.b16 %v587, %v586
      %v603 = vpack.c.b16 %v589, %v588
      %v604 = vpack.c.b16 %v591, %v590
      %v605 = vpack.c.b16 %v593, %v592
      %v606 = vpack.c.b16 %v595, %v594
      %v607 = vpack.c.b16 %v597, %v596
      %v608 = vpack.c.b16 %v599, %v598
      %v609 = vpack.c.b16 %v601, %v600
      %618 = vmatpush.bf16.msra.mxu0 %v609
      %619 = vmatpush.bf16.msra.mxu0 %v608
      %620 = vmatpush.bf16.msra.mxu0 %v607
      %621 = vmatpush.bf16.msra.mxu0 %v606
      %622 = vmatpush.bf16.msra.mxu0 %v605
      %623 = vmatpush.bf16.msra.mxu0 %v604
      %624 = vmatpush.bf16.msra.mxu0 %v603
      %625 = vmatpush.bf16.msra.mxu0 %v602
      %626 = vmatmul.bf16.gmra.mxu0 %v542
      %v627 = vpop.f32.mrf.mxu0
      %v628 = vadd.f32 %v568, %v627
      %v629 = vpop.f32.mrf.mxu0
      %v630 = vadd.f32 %v568, %v629
      %631 = vmatmul.bf16.gmra.mxu0 %v543
      %v632 = vpop.f32.mrf.mxu0
      %v633 = vadd.f32 %v568, %v632
      %v634 = vpop.f32.mrf.mxu0
      %v635 = vadd.f32 %v568, %v634
      %636 = vmatmul.bf16.gmra.mxu0 %v544
      %v637 = vpop.f32.mrf.mxu0
      %v638 = vadd.f32 %v568, %v637
      %v639 = vpop.f32.mrf.mxu0
      %v640 = vadd.f32 %v568, %v639
      %641 = vmatmul.bf16.gmra.mxu0 %v545
      %v642 = vpop.f32.mrf.mxu0
      %v643 = vadd.f32 %v568, %v642
      %v644 = vpop.f32.mrf.mxu0
      %v645 = vadd.f32 %v568, %v644
      %646 = vmatmul.bf16.gmra.mxu0 %v546
      %v647 = vpop.f32.mrf.mxu0
      %v648 = vadd.f32 %v568, %v647
      %v649 = vpop.f32.mrf.mxu0
      %v650 = vadd.f32 %v568, %v649
      %651 = vmatmul.bf16.gmra.mxu0 %v547
      %v652 = vpop.f32.mrf.mxu0
      %v653 = vadd.f32 %v568, %v652
      %v654 = vpop.f32.mrf.mxu0
      %v655 = vadd.f32 %v568, %v654
      %656 = vmatmul.bf16.gmra.mxu0 %v548
      %v657 = vpop.f32.mrf.mxu0
      %v658 = vadd.f32 %v568, %v657
      %v659 = vpop.f32.mrf.mxu0
      %v660 = vadd.f32 %v568, %v659
      %661 = vmatmul.bf16.gmra.mxu0 %v549
      %v662 = vpop.f32.mrf.mxu0
      %v663 = vadd.f32 %v568, %v662
      %v664 = vpop.f32.mrf.mxu0
      %v665 = vadd.f32 %v568, %v664
      %666 = vdwg.mxu0
      %v667 = vmax.f32 %v628, 0.0
      %v668 = vmax.f32 %v630, 0.0
      %v669 = vmax.f32 %v633, 0.0
      %v670 = vmax.f32 %v635, 0.0
      %v671 = vmax.f32 %v638, 0.0
      %v672 = vmax.f32 %v640, 0.0
      %v673 = vmax.f32 %v643, 0.0
      %v674 = vmax.f32 %v645, 0.0
      %v675 = vmax.f32 %v648, 0.0
      %v676 = vmax.f32 %v650, 0.0
      %v677 = vmax.f32 %v653, 0.0
      %v678 = vmax.f32 %v655, 0.0
      %v679 = vmax.f32 %v658, 0.0
      %v680 = vmax.f32 %v660, 0.0
      %v681 = vmax.f32 %v663, 0.0
      %v682 = vmax.f32 %v665, 0.0
      %v683 = vpack.c.bf16 %v667, %v667
      %v684 = vpack.c.bf16 %v668, %v668
      %v685 = vpack.c.bf16 %v669, %v669
      %v686 = vpack.c.bf16 %v670, %v670
      %v687 = vpack.c.bf16 %v671, %v671
      %v688 = vpack.c.bf16 %v672, %v672
      %v689 = vpack.c.bf16 %v673, %v673
      %v690 = vpack.c.bf16 %v674, %v674
      %v691 = vpack.c.bf16 %v675, %v675
      %v692 = vpack.c.bf16 %v676, %v676
      %v693 = vpack.c.bf16 %v677, %v677
      %v694 = vpack.c.bf16 %v678, %v678
      %v695 = vpack.c.bf16 %v679, %v679
      %v696 = vpack.c.bf16 %v680, %v680
      %v697 = vpack.c.bf16 %v681, %v681
      %v698 = vpack.c.bf16 %v682, %v682
      %v715 = vunpack.c.l.b16 %v683
      %v716 = vunpack.c.l.b16 %v684
      %v717 = vunpack.c.l.b16 %v685
      %v718 = vunpack.c.l.b16 %v686
      %v719 = vunpack.c.l.b16 %v687
      %v720 = vunpack.c.l.b16 %v688
      %v721 = vunpack.c.l.b16 %v689
      %v722 = vunpack.c.l.b16 %v690
      %v723 = vunpack.c.l.b16 %v691
      %v724 = vunpack.c.l.b16 %v692
      %v725 = vunpack.c.l.b16 %v693
      %v726 = vunpack.c.l.b16 %v694
      %v727 = vunpack.c.l.b16 %v695
      %v728 = vunpack.c.l.b16 %v696
      %v729 = vunpack.c.l.b16 %v697
      %v730 = vunpack.c.l.b16 %v698
      %v731 = vpack.c.b16 %v716, %v715
      %v732 = vpack.c.b16 %v718, %v717
      %v733 = vpack.c.b16 %v720, %v719
      %v734 = vpack.c.b16 %v722, %v721
      %v735 = vpack.c.b16 %v724, %v723
      %v736 = vpack.c.b16 %v726, %v725
      %v737 = vpack.c.b16 %v728, %v727
      %v738 = vpack.c.b16 %v730, %v729
      %747 = vmatpush.bf16.msra.mxu0 %v738
      %748 = vmatpush.bf16.msra.mxu0 %v737
      %749 = vmatpush.bf16.msra.mxu0 %v736
      %750 = vmatpush.bf16.msra.mxu0 %v735
      %751 = vmatpush.bf16.msra.mxu0 %v734
      %752 = vmatpush.bf16.msra.mxu0 %v733
      %753 = vmatpush.bf16.msra.mxu0 %v732
      %754 = vmatpush.bf16.msra.mxu0 %v731
      %755 = vmatmul.bf16.gmra.mxu0 %v379
      %v756 = vpop.f32.mrf.mxu0
      %v757 = vadd.f32 0.0, %v756
      %v758 = vpop.f32.mrf.mxu0
      %v759 = vadd.f32 0.0, %v758
      %760 = vmatmul.bf16.gmra.mxu0 %v380
      %v761 = vpop.f32.mrf.mxu0
      %v762 = vadd.f32 0.0, %v761
      %v763 = vpop.f32.mrf.mxu0
      %v764 = vadd.f32 0.0, %v763
      %765 = vmatmul.bf16.gmra.mxu0 %v381
      %v766 = vpop.f32.mrf.mxu0
      %v767 = vadd.f32 0.0, %v766
      %v768 = vpop.f32.mrf.mxu0
      %v769 = vadd.f32 0.0, %v768
      %770 = vmatmul.bf16.gmra.mxu0 %v382
      %v771 = vpop.f32.mrf.mxu0
      %v772 = vadd.f32 0.0, %v771
      %v773 = vpop.f32.mrf.mxu0
      %v774 = vadd.f32 0.0, %v773
      %775 = vmatmul.bf16.gmra.mxu0 %v383
      %v776 = vpop.f32.mrf.mxu0
      %v777 = vadd.f32 0.0, %v776
      %v778 = vpop.f32.mrf.mxu0
      %v779 = vadd.f32 0.0, %v778
      %780 = vmatmul.bf16.gmra.mxu0 %v384
      %v781 = vpop.f32.mrf.mxu0
      %v782 = vadd.f32 0.0, %v781
      %v783 = vpop.f32.mrf.mxu0
      %v784 = vadd.f32 0.0, %v783
      %785 = vmatmul.bf16.gmra.mxu0 %v385
      %v786 = vpop.f32.mrf.mxu0
      %v787 = vadd.f32 0.0, %v786
      %v788 = vpop.f32.mrf.mxu0
      %v789 = vadd.f32 0.0, %v788
      %790 = vmatmul.bf16.gmra.mxu0 %v386
      %v791 = vpop.f32.mrf.mxu0
      %v792 = vadd.f32 0.0, %v791
      %v793 = vpop.f32.mrf.mxu0
      %v794 = vadd.f32 0.0, %v793
      %795 = vdwg.mxu0
      %s796 = sld [smem:[#allocation3 + $0x1]]
      %v797 = vunpack.c.l.bf16 %v683
      %v798 = vunpack.c.l.bf16 %v684
      %v799 = vunpack.c.l.bf16 %v685
      %v800 = vunpack.c.l.bf16 %v686
      %v801 = vunpack.c.l.bf16 %v687
      %v802 = vunpack.c.l.bf16 %v688
      %v803 = vunpack.c.l.bf16 %v689
      %v804 = vunpack.c.l.bf16 %v690
      %v805 = vunpack.c.l.bf16 %v691
      %v806 = vunpack.c.l.bf16 %v692
      %v807 = vunpack.c.l.bf16 %v693
      %v808 = vunpack.c.l.bf16 %v694
      %v809 = vunpack.c.l.bf16 %v695
      %v810 = vunpack.c.l.bf16 %v696
      %v811 = vunpack.c.l.bf16 %v697
      %v812 = vunpack.c.l.bf16 %v698
      %v813 = vstv %s796
      %v814 = vmul.f32 %v813, %v797
      %v815 = vmul.f32 %v813, %v798
      %v816 = vmul.f32 %v813, %v799
      %v817 = vmul.f32 %v813, %v800
      %v818 = vmul.f32 %v813, %v801
      %v819 = vmul.f32 %v813, %v802
      %v820 = vmul.f32 %v813, %v803
      %v821 = vmul.f32 %v813, %v804
      %v822 = vmul.f32 %v813, %v805
      %v823 = vmul.f32 %v813, %v806
      %v824 = vmul.f32 %v813, %v807
      %v825 = vmul.f32 %v813, %v808
      %v826 = vmul.f32 %v813, %v809
      %v827 = vmul.f32 %v813, %v810
      %v828 = vmul.f32 %v813, %v811
      %v829 = vmul.f32 %v813, %v812
      %v830 = vadd.f32 %v814, %v757
      %v831 = vadd.f32 %v815, %v759
      %v832 = vadd.f32 %v816, %v762
      %v833 = vadd.f32 %v817, %v764
      %v834 = vadd.f32 %v818, %v767
      %v835 = vadd.f32 %v819, %v769
      %v836 = vadd.f32 %v820, %v772
      %v837 = vadd.f32 %v821, %v774
      %v838 = vadd.f32 %v822, %v777
      %v839 = vadd.f32 %v823, %v779
      %v840 = vadd.f32 %v824, %v782
      %v841 = vadd.f32 %v825, %v784
      %v842 = vadd.f32 %v826, %v787
      %v843 = vadd.f32 %v827, %v789
      %v844 = vadd.f32 %v828, %v792
      %v845 = vadd.f32 %v829, %v794
      %v846 = vpack.c.bf16 %v831, %v830
      %v847 = vpack.c.bf16 %v833, %v832
      %v848 = vpack.c.bf16 %v835, %v834
      %v849 = vpack.c.bf16 %v837, %v836
      %v850 = vpack.c.bf16 %v839, %v838
      %v851 = vpack.c.bf16 %v841, %v840
      %v852 = vpack.c.bf16 %v843, %v842
      %v853 = vpack.c.bf16 %v845, %v844
      %s854 = scalar_lea.vmem %s3, 64
      %v855 = vld [vmem:[%s854] sm:$0xf]
      %v856 = vld [vmem:[%s854 + $0x4] sm:$0xf]
      %v857 = vld [vmem:[%s854 + $0x8] sm:$0xf]
      %v858 = vld [vmem:[%s854 + $0xc] sm:$0xf]
      %v859 = vld [vmem:[%s854 + $0x10] sm:$0xf]
      %v860 = vld [vmem:[%s854 + $0x14] sm:$0xf]
      %v861 = vld [vmem:[%s854 + $0x18] sm:$0xf]
      %v862 = vld [vmem:[%s854 + $0x1c] sm:$0xf]
      %v863 = vld [vmem:[%s854 + $0x20] sm:$0xf]
      %v864 = vld [vmem:[%s854 + $0x24] sm:$0xf]
      %v865 = vld [vmem:[%s854 + $0x28] sm:$0xf]
      %v866 = vld [vmem:[%s854 + $0x2c] sm:$0xf]
      %v867 = vld [vmem:[%s854 + $0x30] sm:$0xf]
      %v868 = vld [vmem:[%s854 + $0x34] sm:$0xf]
      %v869 = vld [vmem:[%s854 + $0x38] sm:$0xf]
      %v870 = vld [vmem:[%s854 + $0x3c] sm:$0xf]
      %s871 = scalar_lea.vmem %s4, 1
      %v872 = vld [vmem:[%s871] sm:$0x1]
      %v874 = vperm.slane %v872, 0
      %v892 = vunpack.c.l.b16 %v855
      %v893 = vunpack.c.l.b16 %v856
      %v894 = vunpack.c.l.b16 %v857
      %v895 = vunpack.c.l.b16 %v858
      %v896 = vunpack.c.l.b16 %v859
      %v897 = vunpack.c.l.b16 %v860
      %v898 = vunpack.c.l.b16 %v861
      %v899 = vunpack.c.l.b16 %v862
      %v900 = vunpack.c.l.b16 %v863
      %v901 = vunpack.c.l.b16 %v864
      %v902 = vunpack.c.l.b16 %v865
      %v903 = vunpack.c.l.b16 %v866
      %v904 = vunpack.c.l.b16 %v867
      %v905 = vunpack.c.l.b16 %v868
      %v906 = vunpack.c.l.b16 %v869
      %v907 = vunpack.c.l.b16 %v870
      %v908 = vpack.c.b16 %v893, %v892
      %v909 = vpack.c.b16 %v895, %v894
      %v910 = vpack.c.b16 %v897, %v896
      %v911 = vpack.c.b16 %v899, %v898
      %v912 = vpack.c.b16 %v901, %v900
      %v913 = vpack.c.b16 %v903, %v902
      %v914 = vpack.c.b16 %v905, %v904
      %v915 = vpack.c.b16 %v907, %v906
      %924 = vmatpush.bf16.msra.mxu0 %v915
      %925 = vmatpush.bf16.msra.mxu0 %v914
      %926 = vmatpush.bf16.msra.mxu0 %v913
      %927 = vmatpush.bf16.msra.mxu0 %v912
      %928 = vmatpush.bf16.msra.mxu0 %v911
      %929 = vmatpush.bf16.msra.mxu0 %v910
      %930 = vmatpush.bf16.msra.mxu0 %v909
      %931 = vmatpush.bf16.msra.mxu0 %v908
      %932 = vmatmul.bf16.gmra.mxu0 %v846
      %v933 = vpop.f32.mrf.mxu0
      %v934 = vadd.f32 %v874, %v933
      %v935 = vpop.f32.mrf.mxu0
      %v936 = vadd.f32 %v874, %v935
      %937 = vmatmul.bf16.gmra.mxu0 %v847
      %v938 = vpop.f32.mrf.mxu0
      %v939 = vadd.f32 %v874, %v938
      %v940 = vpop.f32.mrf.mxu0
      %v941 = vadd.f32 %v874, %v940
      %942 = vmatmul.bf16.gmra.mxu0 %v848
      %v943 = vpop.f32.mrf.mxu0
      %v944 = vadd.f32 %v874, %v943
      %v945 = vpop.f32.mrf.mxu0
      %v946 = vadd.f32 %v874, %v945
      %947 = vmatmul.bf16.gmra.mxu0 %v849
      %v948 = vpop.f32.mrf.mxu0
      %v949 = vadd.f32 %v874, %v948
      %v950 = vpop.f32.mrf.mxu0
      %v951 = vadd.f32 %v874, %v950
      %952 = vmatmul.bf16.gmra.mxu0 %v850
      %v953 = vpop.f32.mrf.mxu0
      %v954 = vadd.f32 %v874, %v953
      %v955 = vpop.f32.mrf.mxu0
      %v956 = vadd.f32 %v874, %v955
      %957 = vmatmul.bf16.gmra.mxu0 %v851
      %v958 = vpop.f32.mrf.mxu0
      %v959 = vadd.f32 %v874, %v958
      %v960 = vpop.f32.mrf.mxu0
      %v961 = vadd.f32 %v874, %v960
      %962 = vmatmul.bf16.gmra.mxu0 %v852
      %v963 = vpop.f32.mrf.mxu0
      %v964 = vadd.f32 %v874, %v963
      %v965 = vpop.f32.mrf.mxu0
      %v966 = vadd.f32 %v874, %v965
      %967 = vmatmul.bf16.gmra.mxu0 %v853
      %v968 = vpop.f32.mrf.mxu0
      %v969 = vadd.f32 %v874, %v968
      %v970 = vpop.f32.mrf.mxu0
      %v971 = vadd.f32 %v874, %v970
      %972 = vdwg.mxu0
      %v973 = vmax.f32 %v934, 0.0
      %v974 = vmax.f32 %v936, 0.0
      %v975 = vmax.f32 %v939, 0.0
      %v976 = vmax.f32 %v941, 0.0
      %v977 = vmax.f32 %v944, 0.0
      %v978 = vmax.f32 %v946, 0.0
      %v979 = vmax.f32 %v949, 0.0
      %v980 = vmax.f32 %v951, 0.0
      %v981 = vmax.f32 %v954, 0.0
      %v982 = vmax.f32 %v956, 0.0
      %v983 = vmax.f32 %v959, 0.0
      %v984 = vmax.f32 %v961, 0.0
      %v985 = vmax.f32 %v964, 0.0
      %v986 = vmax.f32 %v966, 0.0
      %v987 = vmax.f32 %v969, 0.0
      %v988 = vmax.f32 %v971, 0.0
      %v989 = vpack.c.bf16 %v973, %v973
      %v990 = vpack.c.bf16 %v974, %v974
      %v991 = vpack.c.bf16 %v975, %v975
      %v992 = vpack.c.bf16 %v976, %v976
      %v993 = vpack.c.bf16 %v977, %v977
      %v994 = vpack.c.bf16 %v978, %v978
      %v995 = vpack.c.bf16 %v979, %v979
      %v996 = vpack.c.bf16 %v980, %v980
      %v997 = vpack.c.bf16 %v981, %v981
      %v998 = vpack.c.bf16 %v982, %v982
      %v999 = vpack.c.bf16 %v983, %v983
      %v1000 = vpack.c.bf16 %v984, %v984
      %v1001 = vpack.c.bf16 %v985, %v985
      %v1002 = vpack.c.bf16 %v986, %v986
      %v1003 = vpack.c.bf16 %v987, %v987
      %v1004 = vpack.c.bf16 %v988, %v988
      %v1021 = vunpack.c.l.b16 %v989
      %v1022 = vunpack.c.l.b16 %v990
      %v1023 = vunpack.c.l.b16 %v991
      %v1024 = vunpack.c.l.b16 %v992
      %v1025 = vunpack.c.l.b16 %v993
      %v1026 = vunpack.c.l.b16 %v994
      %v1027 = vunpack.c.l.b16 %v995
      %v1028 = vunpack.c.l.b16 %v996
      %v1029 = vunpack.c.l.b16 %v997
      %v1030 = vunpack.c.l.b16 %v998
      %v1031 = vunpack.c.l.b16 %v999
      %v1032 = vunpack.c.l.b16 %v1000
      %v1033 = vunpack.c.l.b16 %v1001
      %v1034 = vunpack.c.l.b16 %v1002
      %v1035 = vunpack.c.l.b16 %v1003
      %v1036 = vunpack.c.l.b16 %v1004
      %v1037 = vpack.c.b16 %v1022, %v1021
      %v1038 = vpack.c.b16 %v1024, %v1023
      %v1039 = vpack.c.b16 %v1026, %v1025
      %v1040 = vpack.c.b16 %v1028, %v1027
      %v1041 = vpack.c.b16 %v1030, %v1029
      %v1042 = vpack.c.b16 %v1032, %v1031
      %v1043 = vpack.c.b16 %v1034, %v1033
      %v1044 = vpack.c.b16 %v1036, %v1035
      %1053 = vmatpush.bf16.msra.mxu0 %v1044
      %1054 = vmatpush.bf16.msra.mxu0 %v1043
      %1055 = vmatpush.bf16.msra.mxu0 %v1042
      %1056 = vmatpush.bf16.msra.mxu0 %v1041
      %1057 = vmatpush.bf16.msra.mxu0 %v1040
      %1058 = vmatpush.bf16.msra.mxu0 %v1039
      %1059 = vmatpush.bf16.msra.mxu0 %v1038
      %1060 = vmatpush.bf16.msra.mxu0 %v1037
      %1061 = vmatmul.bf16.gmra.mxu0 %v379
      %v1062 = vpop.f32.mrf.mxu0
      %v1063 = vadd.f32 0.0, %v1062
      %v1064 = vpop.f32.mrf.mxu0
      %v1065 = vadd.f32 0.0, %v1064
      %1066 = vmatmul.bf16.gmra.mxu0 %v380
      %v1067 = vpop.f32.mrf.mxu0
      %v1068 = vadd.f32 0.0, %v1067
      %v1069 = vpop.f32.mrf.mxu0
      %v1070 = vadd.f32 0.0, %v1069
      %1071 = vmatmul.bf16.gmra.mxu0 %v381
      %v1072 = vpop.f32.mrf.mxu0
      %v1073 = vadd.f32 0.0, %v1072
      %v1074 = vpop.f32.mrf.mxu0
      %v1075 = vadd.f32 0.0, %v1074
      %1076 = vmatmul.bf16.gmra.mxu0 %v382
      %v1077 = vpop.f32.mrf.mxu0
      %v1078 = vadd.f32 0.0, %v1077
      %v1079 = vpop.f32.mrf.mxu0
      %v1080 = vadd.f32 0.0, %v1079
      %1081 = vmatmul.bf16.gmra.mxu0 %v383
      %v1082 = vpop.f32.mrf.mxu0
      %v1083 = vadd.f32 0.0, %v1082
      %v1084 = vpop.f32.mrf.mxu0
      %v1085 = vadd.f32 0.0, %v1084
      %1086 = vmatmul.bf16.gmra.mxu0 %v384
      %v1087 = vpop.f32.mrf.mxu0
      %v1088 = vadd.f32 0.0, %v1087
      %v1089 = vpop.f32.mrf.mxu0
      %v1090 = vadd.f32 0.0, %v1089
      %1091 = vmatmul.bf16.gmra.mxu0 %v385
      %v1092 = vpop.f32.mrf.mxu0
      %v1093 = vadd.f32 0.0, %v1092
      %v1094 = vpop.f32.mrf.mxu0
      %v1095 = vadd.f32 0.0, %v1094
      %1096 = vmatmul.bf16.gmra.mxu0 %v386
      %v1097 = vpop.f32.mrf.mxu0
      %v1098 = vadd.f32 0.0, %v1097
      %v1099 = vpop.f32.mrf.mxu0
      %v1100 = vadd.f32 0.0, %v1099
      %1101 = vdwg.mxu0
      %s1102 = sld [smem:[#allocation3 + $0x2]]
      %v1103 = vunpack.c.l.bf16 %v989
      %v1104 = vunpack.c.l.bf16 %v990
      %v1105 = vunpack.c.l.bf16 %v991
      %v1106 = vunpack.c.l.bf16 %v992
      %v1107 = vunpack.c.l.bf16 %v993
      %v1108 = vunpack.c.l.bf16 %v994
      %v1109 = vunpack.c.l.bf16 %v995
      %v1110 = vunpack.c.l.bf16 %v996
      %v1111 = vunpack.c.l.bf16 %v997
      %v1112 = vunpack.c.l.bf16 %v998
      %v1113 = vunpack.c.l.bf16 %v999
      %v1114 = vunpack.c.l.bf16 %v1000
      %v1115 = vunpack.c.l.bf16 %v1001
      %v1116 = vunpack.c.l.bf16 %v1002
      %v1117 = vunpack.c.l.bf16 %v1003
      %v1118 = vunpack.c.l.bf16 %v1004
      %v1119 = vstv %s1102
      %v1120 = vmul.f32 %v1119, %v1103
      %v1121 = vmul.f32 %v1119, %v1104
      %v1122 = vmul.f32 %v1119, %v1105
      %v1123 = vmul.f32 %v1119, %v1106
      %v1124 = vmul.f32 %v1119, %v1107
      %v1125 = vmul.f32 %v1119, %v1108
      %v1126 = vmul.f32 %v1119, %v1109
      %v1127 = vmul.f32 %v1119, %v1110
      %v1128 = vmul.f32 %v1119, %v1111
      %v1129 = vmul.f32 %v1119, %v1112
      %v1130 = vmul.f32 %v1119, %v1113
      %v1131 = vmul.f32 %v1119, %v1114
      %v1132 = vmul.f32 %v1119, %v1115
      %v1133 = vmul.f32 %v1119, %v1116
      %v1134 = vmul.f32 %v1119, %v1117
      %v1135 = vmul.f32 %v1119, %v1118
      %v1136 = vadd.f32 %v1120, %v1063
      %v1137 = vadd.f32 %v1121, %v1065
      %v1138 = vadd.f32 %v1122, %v1068
      %v1139 = vadd.f32 %v1123, %v1070
      %v1140 = vadd.f32 %v1124, %v1073
      %v1141 = vadd.f32 %v1125, %v1075
      %v1142 = vadd.f32 %v1126, %v1078
      %v1143 = vadd.f32 %v1127, %v1080
      %v1144 = vadd.f32 %v1128, %v1083
      %v1145 = vadd.f32 %v1129, %v1085
      %v1146 = vadd.f32 %v1130, %v1088
      %v1147 = vadd.f32 %v1131, %v1090
      %v1148 = vadd.f32 %v1132, %v1093
      %v1149 = vadd.f32 %v1133, %v1095
      %v1150 = vadd.f32 %v1134, %v1098
      %v1151 = vadd.f32 %v1135, %v1100
      %v1152 = vpack.c.bf16 %v1137, %v1136
      %v1153 = vpack.c.bf16 %v1139, %v1138
      %v1154 = vpack.c.bf16 %v1141, %v1140
      %v1155 = vpack.c.bf16 %v1143, %v1142
      %v1156 = vpack.c.bf16 %v1145, %v1144
      %v1157 = vpack.c.bf16 %v1147, %v1146
      %v1158 = vpack.c.bf16 %v1149, %v1148
      %v1159 = vpack.c.bf16 %v1151, %v1150
      %s1160 = scalar_lea.vmem %s3, 128
      %v1161 = vld [vmem:[%s1160] sm:$0xf]
      %v1162 = vld [vmem:[%s1160 + $0x4] sm:$0xf]
      %v1163 = vld [vmem:[%s1160 + $0x8] sm:$0xf]
      %v1164 = vld [vmem:[%s1160 + $0xc] sm:$0xf]
      %v1165 = vld [vmem:[%s1160 + $0x10] sm:$0xf]
      %v1166 = vld [vmem:[%s1160 + $0x14] sm:$0xf]
      %v1167 = vld [vmem:[%s1160 + $0x18] sm:$0xf]
      %v1168 = vld [vmem:[%s1160 + $0x1c] sm:$0xf]
      %v1169 = vld [vmem:[%s1160 + $0x20] sm:$0xf]
      %v1170 = vld [vmem:[%s1160 + $0x24] sm:$0xf]
      %v1171 = vld [vmem:[%s1160 + $0x28] sm:$0xf]
      %v1172 = vld [vmem:[%s1160 + $0x2c] sm:$0xf]
      %v1173 = vld [vmem:[%s1160 + $0x30] sm:$0xf]
      %v1174 = vld [vmem:[%s1160 + $0x34] sm:$0xf]
      %v1175 = vld [vmem:[%s1160 + $0x38] sm:$0xf]
      %v1176 = vld [vmem:[%s1160 + $0x3c] sm:$0xf]
      %s1177 = scalar_lea.vmem %s4, 2
      %v1178 = vld [vmem:[%s1177] sm:$0x1]
      %v1180 = vperm.slane %v1178, 0
      %v1198 = vunpack.c.l.b16 %v1161
      %v1199 = vunpack.c.l.b16 %v1162
      %v1200 = vunpack.c.l.b16 %v1163
      %v1201 = vunpack.c.l.b16 %v1164
      %v1202 = vunpack.c.l.b16 %v1165
      %v1203 = vunpack.c.l.b16 %v1166
      %v1204 = vunpack.c.l.b16 %v1167
      %v1205 = vunpack.c.l.b16 %v1168
      %v1206 = vunpack.c.l.b16 %v1169
      %v1207 = vunpack.c.l.b16 %v1170
      %v1208 = vunpack.c.l.b16 %v1171
      %v1209 = vunpack.c.l.b16 %v1172
      %v1210 = vunpack.c.l.b16 %v1173
      %v1211 = vunpack.c.l.b16 %v1174
      %v1212 = vunpack.c.l.b16 %v1175
      %v1213 = vunpack.c.l.b16 %v1176
      %v1214 = vpack.c.b16 %v1199, %v1198
      %v1215 = vpack.c.b16 %v1201, %v1200
      %v1216 = vpack.c.b16 %v1203, %v1202
      %v1217 = vpack.c.b16 %v1205, %v1204
      %v1218 = vpack.c.b16 %v1207, %v1206
      %v1219 = vpack.c.b16 %v1209, %v1208
      %v1220 = vpack.c.b16 %v1211, %v1210
      %v1221 = vpack.c.b16 %v1213, %v1212
      %1230 = vmatpush.bf16.msra.mxu0 %v1221
      %1231 = vmatpush.bf16.msra.mxu0 %v1220
      %1232 = vmatpush.bf16.msra.mxu0 %v1219
      %1233 = vmatpush.bf16.msra.mxu0 %v1218
      %1234 = vmatpush.bf16.msra.mxu0 %v1217
      %1235 = vmatpush.bf16.msra.mxu0 %v1216
      %1236 = vmatpush.bf16.msra.mxu0 %v1215
      %1237 = vmatpush.bf16.msra.mxu0 %v1214
      %1238 = vmatmul.bf16.gmra.mxu0 %v1152
      %v1239 = vpop.f32.mrf.mxu0
      %v1240 = vadd.f32 %v1180, %v1239
      %v1241 = vpop.f32.mrf.mxu0
      %v1242 = vadd.f32 %v1180, %v1241
      %1243 = vmatmul.bf16.gmra.mxu0 %v1153
      %v1244 = vpop.f32.mrf.mxu0
      %v1245 = vadd.f32 %v1180, %v1244
      %v1246 = vpop.f32.mrf.mxu0
      %v1247 = vadd.f32 %v1180, %v1246
      %1248 = vmatmul.bf16.gmra.mxu0 %v1154
      %v1249 = vpop.f32.mrf.mxu0
      %v1250 = vadd.f32 %v1180, %v1249
      %v1251 = vpop.f32.mrf.mxu0
      %v1252 = vadd.f32 %v1180, %v1251
      %1253 = vmatmul.bf16.gmra.mxu0 %v1155
      %v1254 = vpop.f32.mrf.mxu0
      %v1255 = vadd.f32 %v1180, %v1254
      %v1256 = vpop.f32.mrf.mxu0
      %v1257 = vadd.f32 %v1180, %v1256
      %1258 = vmatmul.bf16.gmra.mxu0 %v1156
      %v1259 = vpop.f32.mrf.mxu0
      %v1260 = vadd.f32 %v1180, %v1259
      %v1261 = vpop.f32.mrf.mxu0
      %v1262 = vadd.f32 %v1180, %v1261
      %1263 = vmatmul.bf16.gmra.mxu0 %v1157
      %v1264 = vpop.f32.mrf.mxu0
      %v1265 = vadd.f32 %v1180, %v1264
      %v1266 = vpop.f32.mrf.mxu0
      %v1267 = vadd.f32 %v1180, %v1266
      %1268 = vmatmul.bf16.gmra.mxu0 %v1158
      %v1269 = vpop.f32.mrf.mxu0
      %v1270 = vadd.f32 %v1180, %v1269
      %v1271 = vpop.f32.mrf.mxu0
      %v1272 = vadd.f32 %v1180, %v1271
      %1273 = vmatmul.bf16.gmra.mxu0 %v1159
      %v1274 = vpop.f32.mrf.mxu0
      %v1275 = vadd.f32 %v1180, %v1274
      %v1276 = vpop.f32.mrf.mxu0
      %v1277 = vadd.f32 %v1180, %v1276
      %1278 = vdwg.mxu0
      %v1279 = vmax.f32 %v1240, 0.0
      %v1280 = vmax.f32 %v1242, 0.0
      %v1281 = vmax.f32 %v1245, 0.0
      %v1282 = vmax.f32 %v1247, 0.0
      %v1283 = vmax.f32 %v1250, 0.0
      %v1284 = vmax.f32 %v1252, 0.0
      %v1285 = vmax.f32 %v1255, 0.0
      %v1286 = vmax.f32 %v1257, 0.0
      %v1287 = vmax.f32 %v1260, 0.0
      %v1288 = vmax.f32 %v1262, 0.0
      %v1289 = vmax.f32 %v1265, 0.0
      %v1290 = vmax.f32 %v1267, 0.0
      %v1291 = vmax.f32 %v1270, 0.0
      %v1292 = vmax.f32 %v1272, 0.0
      %v1293 = vmax.f32 %v1275, 0.0
      %v1294 = vmax.f32 %v1277, 0.0
      %v1295 = vpack.c.bf16 %v1280, %v1279
      %v1296 = vpack.c.bf16 %v1282, %v1281
      %v1297 = vpack.c.bf16 %v1284, %v1283
      %v1298 = vpack.c.bf16 %v1286, %v1285
      %v1299 = vpack.c.bf16 %v1288, %v1287
      %v1300 = vpack.c.bf16 %v1290, %v1289
      %v1301 = vpack.c.bf16 %v1292, %v1291
      %v1302 = vpack.c.bf16 %v1294, %v1293
      %v1303 = vld [vmem:[%s306] sm:$0xf]
      %v1304 = vld [vmem:[%s306 + $0x4] sm:$0xf]
      %v1305 = vld [vmem:[%s306 + $0x8] sm:$0xf]
      %v1306 = vld [vmem:[%s306 + $0xc] sm:$0xf]
      %v1307 = vld [vmem:[%s306 + $0x10] sm:$0xf]
      %v1308 = vld [vmem:[%s306 + $0x14] sm:$0xf]
      %v1309 = vld [vmem:[%s306 + $0x18] sm:$0xf]
      %v1310 = vld [vmem:[%s306 + $0x1c] sm:$0xf]
      %v1311 = vld [vmem:[%s306 + $0x20] sm:$0xf]
      %v1312 = vld [vmem:[%s306 + $0x24] sm:$0xf]
      %v1313 = vld [vmem:[%s306 + $0x28] sm:$0xf]
      %v1314 = vld [vmem:[%s306 + $0x2c] sm:$0xf]
      %v1315 = vld [vmem:[%s306 + $0x30] sm:$0xf]
      %v1316 = vld [vmem:[%s306 + $0x34] sm:$0xf]
      %v1317 = vld [vmem:[%s306 + $0x38] sm:$0xf]
      %v1318 = vld [vmem:[%s306 + $0x3c] sm:$0xf]
      %v1319 = vld [vmem:[%s309] sm:$0x1]
      %v1321 = vperm.slane %v1319, 0
      %v1339 = vunpack.c.l.b16 %v1303
      %v1340 = vunpack.c.l.b16 %v1304
      %v1341 = vunpack.c.l.b16 %v1305
      %v1342 = vunpack.c.l.b16 %v1306
      %v1343 = vunpack.c.l.b16 %v1307
      %v1344 = vunpack.c.l.b16 %v1308
      %v1345 = vunpack.c.l.b16 %v1309
      %v1346 = vunpack.c.l.b16 %v1310
      %v1347 = vunpack.c.l.b16 %v1311
      %v1348 = vunpack.c.l.b16 %v1312
      %v1349 = vunpack.c.l.b16 %v1313
      %v1350 = vunpack.c.l.b16 %v1314
      %v1351 = vunpack.c.l.b16 %v1315
      %v1352 = vunpack.c.l.b16 %v1316
      %v1353 = vunpack.c.l.b16 %v1317
      %v1354 = vunpack.c.l.b16 %v1318
      %v1355 = vpack.c.b16 %v1340, %v1339
      %v1356 = vpack.c.b16 %v1342, %v1341
      %v1357 = vpack.c.b16 %v1344, %v1343
      %v1358 = vpack.c.b16 %v1346, %v1345
      %v1359 = vpack.c.b16 %v1348, %v1347
      %v1360 = vpack.c.b16 %v1350, %v1349
      %v1361 = vpack.c.b16 %v1352, %v1351
      %v1362 = vpack.c.b16 %v1354, %v1353
      %1371 = vmatpush.bf16.msra.mxu0 %v1362
      %1372 = vmatpush.bf16.msra.mxu0 %v1361
      %1373 = vmatpush.bf16.msra.mxu0 %v1360
      %1374 = vmatpush.bf16.msra.mxu0 %v1359
      %1375 = vmatpush.bf16.msra.mxu0 %v1358
      %1376 = vmatpush.bf16.msra.mxu0 %v1357
      %1377 = vmatpush.bf16.msra.mxu0 %v1356
      %1378 = vmatpush.bf16.msra.mxu0 %v1355
      %1379 = vmatmul.bf16.gmra.mxu0 %v1295
      %v1380 = vpop.f32.mrf.mxu0
      %v1381 = vadd.f32 %v1321, %v1380
      %v1382 = vpop.f32.mrf.mxu0
      %v1383 = vadd.f32 %v1321, %v1382
      %1384 = vmatmul.bf16.gmra.mxu0 %v1296
      %v1385 = vpop.f32.mrf.mxu0
      %v1386 = vadd.f32 %v1321, %v1385
      %v1387 = vpop.f32.mrf.mxu0
      %v1388 = vadd.f32 %v1321, %v1387
      %1389 = vmatmul.bf16.gmra.mxu0 %v1297
      %v1390 = vpop.f32.mrf.mxu0
      %v1391 = vadd.f32 %v1321, %v1390
      %v1392 = vpop.f32.mrf.mxu0
      %v1393 = vadd.f32 %v1321, %v1392
      %1394 = vmatmul.bf16.gmra.mxu0 %v1298
      %v1395 = vpop.f32.mrf.mxu0
      %v1396 = vadd.f32 %v1321, %v1395
      %v1397 = vpop.f32.mrf.mxu0
      %v1398 = vadd.f32 %v1321, %v1397
      %1399 = vmatmul.bf16.gmra.mxu0 %v1299
      %v1400 = vpop.f32.mrf.mxu0
      %v1401 = vadd.f32 %v1321, %v1400
      %v1402 = vpop.f32.mrf.mxu0
      %v1403 = vadd.f32 %v1321, %v1402
      %1404 = vmatmul.bf16.gmra.mxu0 %v1300
      %v1405 = vpop.f32.mrf.mxu0
      %v1406 = vadd.f32 %v1321, %v1405
      %v1407 = vpop.f32.mrf.mxu0
      %v1408 = vadd.f32 %v1321, %v1407
      %1409 = vmatmul.bf16.gmra.mxu0 %v1301
      %v1410 = vpop.f32.mrf.mxu0
      %v1411 = vadd.f32 %v1321, %v1410
      %v1412 = vpop.f32.mrf.mxu0
      %v1413 = vadd.f32 %v1321, %v1412
      %1414 = vmatmul.bf16.gmra.mxu0 %v1302
      %v1415 = vpop.f32.mrf.mxu0
      %v1416 = vadd.f32 %v1321, %v1415
      %v1417 = vpop.f32.mrf.mxu0
      %v1418 = vadd.f32 %v1321, %v1417
      %1419 = vdwg.mxu0
      %p1420 = scmp.eq.s32.totalorder %s26, 0
      // Predicated region
      $region45: #{gin_decoder_forward.1} parent=43 // pred_check
        %p1421 = pneg %p1420
      $region46: #{gin_decoder_forward.1} parent=43 // pred_check_branch
        %1423 = sbr.rel (%p1421) target = $region48
      $region47: #{gin_decoder_forward.1} parent=43 // pred_region
        %1424 = vst [vmem:[%s314] sm:$0xff] %v1381
        %1425 = vst [vmem:[%s314 + $0x8] sm:$0xff] %v1383
        %1426 = vst [vmem:[%s314 + $0x10] sm:$0xff] %v1386
        %1427 = vst [vmem:[%s314 + $0x18] sm:$0xff] %v1388
        %1428 = vst [vmem:[%s314 + $0x20] sm:$0xff] %v1391
        %1429 = vst [vmem:[%s314 + $0x28] sm:$0xff] %v1393
        %1430 = vst [vmem:[%s314 + $0x30] sm:$0xff] %v1396
        %1431 = vst [vmem:[%s314 + $0x38] sm:$0xff] %v1398
        %1432 = vst [vmem:[%s314 + $0x40] sm:$0xff] %v1401
        %1433 = vst [vmem:[%s314 + $0x48] sm:$0xff] %v1403
        %1434 = vst [vmem:[%s314 + $0x50] sm:$0xff] %v1406
        %1435 = vst [vmem:[%s314 + $0x58] sm:$0xff] %v1408
        %1436 = vst [vmem:[%s314 + $0x60] sm:$0xff] %v1411
        %1437 = vst [vmem:[%s314 + $0x68] sm:$0xff] %v1413
        %1438 = vst [vmem:[%s314 + $0x70] sm:$0xff] %v1416
        %1439 = vst [vmem:[%s314 + $0x78] sm:$0xff] %v1418
      $region48: #{gin_decoder_forward.1} parent=43 // pred_fallthru
        _
      %p1440 = scmp.eq.s32.totalorder %s26, 1
      // Predicated region
      $region49: #{gin_decoder_forward.1} parent=43 // pred_check
        %p1441 = pneg %p1440
      $region50: #{gin_decoder_forward.1} parent=43 // pred_check_branch
        %1443 = sbr.rel (%p1441) target = $region52
      $region51: #{gin_decoder_forward.1} parent=43 // pred_region
        %v1444 = vand.u32 2147483647, %v1381
        %v1445 = vand.u32 2147483647, %v1383
        %v1446 = vand.u32 2147483647, %v1386
        %v1447 = vand.u32 2147483647, %v1388
        %v1448 = vand.u32 2147483647, %v1391
        %v1449 = vand.u32 2147483647, %v1393
        %v1450 = vand.u32 2147483647, %v1396
        %v1451 = vand.u32 2147483647, %v1398
        %v1452 = vand.u32 2147483647, %v1401
        %v1453 = vand.u32 2147483647, %v1403
        %v1454 = vand.u32 2147483647, %v1406
        %v1455 = vand.u32 2147483647, %v1408
        %v1456 = vand.u32 2147483647, %v1411
        %v1457 = vand.u32 2147483647, %v1413
        %v1458 = vand.u32 2147483647, %v1416
        %v1459 = vand.u32 2147483647, %v1418
        %1460 = vst [vmem:[%s314] sm:$0xff] %v1444
        %1461 = vst [vmem:[%s314 + $0x8] sm:$0xff] %v1445
        %1462 = vst [vmem:[%s314 + $0x10] sm:$0xff] %v1446
        %1463 = vst [vmem:[%s314 + $0x18] sm:$0xff] %v1447
        %1464 = vst [vmem:[%s314 + $0x20] sm:$0xff] %v1448
        %1465 = vst [vmem:[%s314 + $0x28] sm:$0xff] %v1449
        %1466 = vst [vmem:[%s314 + $0x30] sm:$0xff] %v1450
        %1467 = vst [vmem:[%s314 + $0x38] sm:$0xff] %v1451
        %1468 = vst [vmem:[%s314 + $0x40] sm:$0xff] %v1452
        %1469 = vst [vmem:[%s314 + $0x48] sm:$0xff] %v1453
        %1470 = vst [vmem:[%s314 + $0x50] sm:$0xff] %v1454
        %1471 = vst [vmem:[%s314 + $0x58] sm:$0xff] %v1455
        %1472 = vst [vmem:[%s314 + $0x60] sm:$0xff] %v1456
        %1473 = vst [vmem:[%s314 + $0x68] sm:$0xff] %v1457
        %1474 = vst [vmem:[%s314 + $0x70] sm:$0xff] %v1458
        %1475 = vst [vmem:[%s314 + $0x78] sm:$0xff] %v1459
      $region52: #{gin_decoder_forward.1} parent=43 // pred_fallthru
        _
      %p1476 = scmp.lt.s32.totalorder %s26, 1
      %s1477 = scalar_select %p1476, %s26, 1
      %s1478 = smul.addr %s1477, 16
      %s1479 = smul.addr %s1478, 8
      %s1480 = scalar_lea.vmem %s7, %s1479
      // Predicated region
      $region53: #{gin_decoder_forward.1} parent=43 // pred_check
        %p1481 = pneg %p190
      $region54: #{gin_decoder_forward.1} parent=43 // pred_check_branch
        %1483 = sbr.rel (%p1481) target = $region56
      $region55: #{gin_decoder_forward.1} parent=43 // pred_region
        _
      $region56: #{gin_decoder_forward.1} parent=43 // pred_fallthru
        _
    $region44: #{gin_decoder_forward.1} parent=5 // pred_fallthru
      _
    %p1484 = scmp.le.s32.totalorder 2, %s21
    // Predicated region
    $region57: #{gin_decoder_forward.1} parent=5 // pred_check
      %p1485 = pneg %p1484
    $region58: #{gin_decoder_forward.1} parent=5 // pred_check_branch
      %1487 = sbr.rel (%p1485) target = $region60
    $region59: #{gin_decoder_forward.1} parent=5 // pred_region
      %s1488 = ssub.s32 %s21, 2
      // Predicated region
      $region61: #{gin_decoder_forward.1} parent=59 // pred_check
        %p1489 = pneg %p196
      $region62: #{gin_decoder_forward.1} parent=59 // pred_check_branch
        %1491 = sbr.rel (%p1489) target = $region64
      $region63: #{gin_decoder_forward.1} parent=59 // pred_region
        %p1492 = scmp.lt.s32.totalorder %s27, 1
        %s1493 = scalar_select %p1492, %s27, 1
        %s1494 = smul.addr %s1493, 16
        %s1495 = smul.addr %s1494, 8
        %s1496 = scalar_lea.vmem %s7, %s1495
      $region64: #{gin_decoder_forward.1} parent=59 // pred_fallthru
        _
    $region60: #{gin_decoder_forward.1} parent=5 // pred_fallthru
      _
  $region6: #{gin_decoder_forward.1} parent=0 // loop_footer
    %s25 = sadd.s32 1, %s21
  $region7: #{gin_decoder_forward.1} parent=0 // loop_footer_branch
    %20 = sbr.rel target = $region3
  $region8: #{gin_decoder_forward.1} parent=0 // loop_exit
    _

</llo_original>
